<compile_context>
chip_gen: v6e
topology: v6e:2x2x1
jax: 0.10.0
libtpu: 0.0.40
codegen_flags: <defaults>
</compile_context>

<pallas_src>
import math

import jax
import jax.numpy as jnp
from jax.experimental import pallas as pl
from jax.experimental.pallas import tpu as pltpu

# "Environment" configuration (deterministic, in-script instead of os.environ)
HIDDEN_SIZE = 32
LSTM_LAYERS = 2
DROPOUT = 0.0          # TODO(synk): dropout is a training-mode no-op between layers; eval forward ignores it.
INPUT_SIZE = 12
PROJ_SIZE = 1


def _cell(gates, c_prev, H):
    """LSTM cell; gates (N, 4H) pre-activations in PyTorch order (i, f, g, o)."""
    sig = jax.nn.sigmoid(gates)                 # one EUP pass, i/f/o slices used
    i_g = sig[:, 0 * H:1 * H]
    f_g = sig[:, 1 * H:2 * H]
    o_g = sig[:, 3 * H:4 * H]
    g_g = jnp.tanh(gates[:, 2 * H:3 * H])       # tanh only on the g slice (1/4 width)
    c_new = f_g * c_prev + i_g * g_g
    h_new = o_g * jnp.tanh(c_new)               # un-projected hidden
    return h_new, c_new


def _make_fused_kernel(T, B, H):
    G4 = 4 * H

    def kernel(x_ref, wih0_ref, b0_ref, wcat_ref, b1_ref, whr_ref, out_ref):
        f32 = jnp.float32

        # ---- bulk layer-0 input projection (off the serial chain): (T*B,12)@(12,4H) ----
        u0 = jnp.dot(x_ref[...], wih0_ref[...],
                     preferred_element_type=f32) + b0_ref[...]            # (T*B, 4H)

        # ---- hoisted constants ----
        wcat = wcat_ref[...]                                               # (H, 12H) = [m0 | a_in | a_rec]
        b1f = jnp.broadcast_to(b1_ref[...], (B, G4))                       # bias broadcast hoisted
        zeros_bh = jnp.zeros((B, H), f32)

        # ---- wavefront step 0: layer 0 at t=0 (all-zero initial state, no matmul) ----
        hid0, c0 = _cell(u0[0:B, :], zeros_bh, H)
        hc = jnp.concatenate([hid0, zeros_bh], axis=0)   # [hid0_{s-1} ; hid1_{s-2}]  (2B, H)
        cc = jnp.concatenate([c0, zeros_bh], axis=0)     # [c0_{s-1}   ; c1_{s-2}]    (2B, H)

        outs = []
        # ---- wavefront steps 1..T-1: (layer0, t=s) and (layer1, t=s-1) in ONE batch ----
        for s in range(1, T):
            # single merged recurrent matmul: (2B,H)@(H,12H), full 8-sublane LHS
            r = jnp.dot(hc, wcat, preferred_element_type=f32)              # (2B, 12H)
            g_top = r[0:B, 0 * G4:1 * G4] + u0[s * B:(s + 1) * B, :]       # layer0 gates, t = s
            g_bot = r[0:B, 1 * G4:2 * G4] + r[B:2 * B, 2 * G4:3 * G4] + b1f  # layer1 gates, t = s-1
            gates = jnp.concatenate([g_top, g_bot], axis=0)                # (2B, 4H) == one (8,128) vreg
            hc, cc = _cell(gates, cc, H)                                   # both layers, one EUP/VPU pass
            outs.append(hc[B:2 * B, :])                                    # un-projected layer-1 hidden, t = s-1

        # ---- final wavefront step: only layer 1 remains (t = T-1) ----
        r = jnp.dot(hc, wcat, preferred_element_type=f32)
        g_bot = r[0:B, 1 * G4:2 * G4] + r[B:2 * B, 2 * G4:3 * G4] + b1f
        hid1_last, _ = _cell(g_bot, cc[B:2 * B, :], H)
        outs.append(hid1_last)

        # ---- deferred output projection (proj_size = 1): h_t = sum_H(hid_t * w_hr) ----
        hid1_all = jnp.concatenate(outs, axis=0)                           # (T*B, H), built once
        out = jnp.sum(hid1_all * whr_ref[...], axis=1, keepdims=True)      # (T*B, 1)
        out_ref[...] = out.astype(out_ref.dtype)

    return kernel


def optiver_model_forward(x, params):
    """x: (B, T, 12) batch-first, like PyTorch.  Returns (B, T, 1)."""
    B, T, in_dim = x.shape
    H = HIDDEN_SIZE
    L = len(params)
    if L != 2:
        # TODO(synk): generalize the diagonal wavefront to arbitrary LSTM_LAYERS.
        raise NotImplementedError("fused wavefront kernel is specialized for LSTM_LAYERS == 2")

    # time-major, flattened rows: (T*B, In)
    x_tm = jnp.transpose(x, (1, 0, 2)).reshape(T * B, in_dim).astype(jnp.float32)

    p0, p1 = params
    wih0 = jnp.asarray(p0["w_ih"].T, jnp.float32)                          # (In, 4H)
    b0 = (p0["b_ih"] + p0["b_hh"])[None, :].astype(jnp.float32)            # (1, 4H)
    # W_hr folded into every recurrent / inter-layer weight:
    m0 = jnp.dot(p0["w_hr"].T, p0["w_hh"].T).astype(jnp.float32)           # (H, 4H)
    a_in = jnp.dot(p0["w_hr"].T, p1["w_ih"].T).astype(jnp.float32)         # (H, 4H)
    a_rec = jnp.dot(p1["w_hr"].T, p1["w_hh"].T).astype(jnp.float32)        # (H, 4H)
    w_cat = jnp.concatenate([m0, a_in, a_rec], axis=1)                     # (H, 12H) merged RHS
    b1 = (p1["b_ih"] + p1["b_hh"])[None, :].astype(jnp.float32)            # (1, 4H)
    whr = jnp.asarray(p1["w_hr"], jnp.float32)                             # (1, H)

    vmem = pl.BlockSpec(memory_space=pltpu.MemorySpace.VMEM)
    out2d = pl.pallas_call(
        _make_fused_kernel(T, B, H),
        out_shape=jax.ShapeDtypeStruct((T * B, PROJ_SIZE), jnp.float32),
        in_specs=[vmem] * 6,
        out_specs=vmem,
    )(x_tm, wih0, b0, w_cat, b1, whr)

    # (T*B, 1) -> (T, B, 1) -> (B, T, 1)
    return jnp.transpose(out2d.reshape(T, B, PROJ_SIZE), (1, 0, 2))


def init_params(key, hidden, layers, input_size):
    """PyTorch-style uniform(-1/sqrt(H), 1/sqrt(H)) init for every tensor."""
    k = 1.0 / math.sqrt(hidden)
    params = []
    for l in range(layers):
        in_dim = input_size if l == 0 else PROJ_SIZE
        key, *ks = jax.random.split(key, 6)
        params.append(dict(
            w_ih=jax.random.uniform(ks[0], (4 * hidden, in_dim), jnp.float32, -k, k),
            w_hh=jax.random.uniform(ks[1], (4 * hidden, PROJ_SIZE), jnp.float32, -k, k),
            b_ih=jax.random.uniform(ks[2], (4 * hidden,), jnp.float32, -k, k),
            b_hh=jax.random.uniform(ks[3], (4 * hidden,), jnp.float32, -k, k),
            w_hr=jax.random.uniform(ks[4], (PROJ_SIZE, hidden), jnp.float32, -k, k),
        ))
    return params


# ---------------- pure-JAX reference (unfused, mirrors PyTorch exactly) ----------------
def reference_forward(x, params):
    B, T, _ = x.shape
    H = HIDDEN_SIZE
    cur = x
    for p in params:
        h = jnp.zeros((B, PROJ_SIZE), jnp.float32)
        c = jnp.zeros((B, H), jnp.float32)
        outs = []
        for t in range(T):
            gates = cur[:, t, :] @ p["w_ih"].T + h @ p["w_hh"].T + p["b_ih"] + p["b_hh"]
            i_g = jax.nn.sigmoid(gates[:, 0 * H:1 * H])
            f_g = jax.nn.sigmoid(gates[:, 1 * H:2 * H])
            g_g = jnp.tanh(gates[:, 2 * H:3 * H])
            o_g = jax.nn.sigmoid(gates[:, 3 * H:4 * H])
            c = f_g * c + i_g * g_g
            h = (o_g * jnp.tanh(c)) @ p["w_hr"].T
            outs.append(h)
        cur = jnp.stack(outs, axis=1)                                      # (B, T, P)
    return cur


if __name__ == "__main__":
    key = jax.random.PRNGKey(0)
    key, xk = jax.random.split(key)

    B, T = 4, 8
    x = jax.random.normal(xk, (B, T, INPUT_SIZE), jnp.float32)

    params = init_params(key, HIDDEN_SIZE, LSTM_LAYERS, INPUT_SIZE)

    fwd = jax.jit(optiver_model_forward)
    out = jax.block_until_ready(fwd(x, params))

    ref = reference_forward(x, params)
    assert out.shape == (B, T, PROJ_SIZE), out.shape
    # W_hr folding reassociates a couple of tiny sums; keep a tight-but-safe tolerance.
    assert jnp.allclose(out, ref, rtol=2e-4, atol=1e-4), \
        float(jnp.max(jnp.abs(out - ref)))

    print("KERNEL_OK")
</pallas_src>

<mosaic_0001>
module attributes {stable_mosaic.version = 11 : i64} {
  func.func @kernel(%arg0: memref<32x12xf32, #tpu.memory_space<vmem>>, %arg1: memref<12x128xf32, #tpu.memory_space<vmem>>, %arg2: memref<1x128xf32, #tpu.memory_space<vmem>>, %arg3: memref<32x384xf32, #tpu.memory_space<vmem>>, %arg4: memref<1x128xf32, #tpu.memory_space<vmem>>, %arg5: memref<1x32xf32, #tpu.memory_space<vmem>>, %arg6: memref<32x1xf32, #tpu.memory_space<vmem>>) attributes {dimension_semantics = [], scalar_prefetch = 0 : i64, scratch_operands = 0 : i64, tpu.core_type = #tpu.core_type<tc>} {
    %c0 = arith.constant 0 : index
    %c0_0 = arith.constant 0 : index
    %0 = vector.load %arg0[%c0, %c0_0] : memref<32x12xf32, #tpu.memory_space<vmem>>, vector<32x12xf32>
    %c0_1 = arith.constant 0 : index
    %c0_2 = arith.constant 0 : index
    %1 = vector.load %arg1[%c0_1, %c0_2] : memref<12x128xf32, #tpu.memory_space<vmem>>, vector<12x128xf32>
    %cst = arith.constant dense<0.000000e+00> : vector<32x128xf32>
    %2 = tpu.matmul %0, %1, %cst {dimension_numbers = #tpu.dot_dimension_numbers<[1], [0], [0], [1], [0, 0, 1, 1], [], []>} : vector<32x12xf32>, vector<12x128xf32>, vector<32x128xf32> -> vector<32x128xf32>
    %c0_3 = arith.constant 0 : index
    %c0_4 = arith.constant 0 : index
    %3 = vector.load %arg2[%c0_3, %c0_4] : memref<1x128xf32, #tpu.memory_space<vmem>>, vector<1x128xf32>
    %4 = vector.broadcast %3 : vector<1x128xf32> to vector<32x128xf32>
    %5 = arith.addf %2, %4 : vector<32x128xf32>
    %c0_5 = arith.constant 0 : index
    %c0_6 = arith.constant 0 : index
    %6 = vector.load %arg3[%c0_5, %c0_6] : memref<32x384xf32, #tpu.memory_space<vmem>>, vector<32x384xf32>
    %c0_7 = arith.constant 0 : index
    %c0_8 = arith.constant 0 : index
    %7 = vector.load %arg4[%c0_7, %c0_8] : memref<1x128xf32, #tpu.memory_space<vmem>>, vector<1x128xf32>
    %8 = vector.shape_cast %7 : vector<1x128xf32> to vector<1x128xf32>
    %9 = vector.broadcast %8 : vector<1x128xf32> to vector<4x128xf32>
    %cst_9 = arith.constant 0.000000e+00 : f32
    %10 = vector.broadcast %cst_9 : f32 to vector<4x32xf32>
    %11 = vector.extract_strided_slice %5 {offsets = [0, 0], sizes = [4, 128], strides = [1, 1]} : vector<32x128xf32> to vector<4x128xf32>
    %12 = arith.negf %11 : vector<4x128xf32>
    %13 = math.exp %12 : vector<4x128xf32>
    %cst_10 = arith.constant 1.000000e+00 : f32
    %14 = vector.broadcast %cst_10 : f32 to vector<4x128xf32>
    %15 = arith.addf %14, %13 : vector<4x128xf32>
    %16 = arith.divf %14, %15 : vector<4x128xf32>
    %17 = vector.extract_strided_slice %16 {offsets = [0, 0], sizes = [4, 32], strides = [1, 1]} : vector<4x128xf32> to vector<4x32xf32>
    %18 = vector.extract_strided_slice %16 {offsets = [0, 32], sizes = [4, 32], strides = [1, 1]} : vector<4x128xf32> to vector<4x32xf32>
    %19 = vector.extract_strided_slice %16 {offsets = [0, 96], sizes = [4, 32], strides = [1, 1]} : vector<4x128xf32> to vector<4x32xf32>
    %20 = vector.extract_strided_slice %11 {offsets = [0, 64], sizes = [4, 32], strides = [1, 1]} : vector<4x128xf32> to vector<4x32xf32>
    %21 = math.tanh %20 : vector<4x32xf32>
    %22 = arith.mulf %18, %10 : vector<4x32xf32>
    %23 = arith.mulf %17, %21 : vector<4x32xf32>
    %24 = arith.addf %22, %23 : vector<4x32xf32>
    %25 = math.tanh %24 : vector<4x32xf32>
    %26 = arith.mulf %19, %25 : vector<4x32xf32>
    %27 = tpu.concatenate %26, %10 in 0 : vector<4x32xf32>, vector<4x32xf32> -> vector<8x32xf32>
    %28 = tpu.concatenate %24, %10 in 0 : vector<4x32xf32>, vector<4x32xf32> -> vector<8x32xf32>
    %cst_11 = arith.constant dense<0.000000e+00> : vector<8x384xf32>
    %29 = tpu.matmul %27, %6, %cst_11 {dimension_numbers = #tpu.dot_dimension_numbers<[1], [0], [0], [1], [0, 0, 1, 1], [], []>} : vector<8x32xf32>, vector<32x384xf32>, vector<8x384xf32> -> vector<8x384xf32>
    %30 = vector.extract_strided_slice %29 {offsets = [0, 0], sizes = [4, 128], strides = [1, 1]} : vector<8x384xf32> to vector<4x128xf32>
    %31 = vector.extract_strided_slice %5 {offsets = [4, 0], sizes = [4, 128], strides = [1, 1]} : vector<32x128xf32> to vector<4x128xf32>
    %32 = arith.addf %30, %31 : vector<4x128xf32>
    %33 = vector.extract_strided_slice %29 {offsets = [0, 128], sizes = [4, 128], strides = [1, 1]} : vector<8x384xf32> to vector<4x128xf32>
    %34 = vector.extract_strided_slice %29 {offsets = [4, 256], sizes = [4, 128], strides = [1, 1]} : vector<8x384xf32> to vector<4x128xf32>
    %35 = arith.addf %33, %34 : vector<4x128xf32>
    %36 = arith.addf %35, %9 : vector<4x128xf32>
    %37 = tpu.concatenate %32, %36 in 0 : vector<4x128xf32>, vector<4x128xf32> -> vector<8x128xf32>
    %38 = arith.negf %37 : vector<8x128xf32>
    %39 = math.exp %38 : vector<8x128xf32>
    %cst_12 = arith.constant 1.000000e+00 : f32
    %40 = vector.broadcast %cst_12 : f32 to vector<8x128xf32>
    %41 = arith.addf %40, %39 : vector<8x128xf32>
    %42 = arith.divf %40, %41 : vector<8x128xf32>
    %43 = vector.extract_strided_slice %42 {offsets = [0, 0], sizes = [8, 32], strides = [1, 1]} : vector<8x128xf32> to vector<8x32xf32>
    %44 = vector.extract_strided_slice %42 {offsets = [0, 32], sizes = [8, 32], strides = [1, 1]} : vector<8x128xf32> to vector<8x32xf32>
    %45 = vector.extract_strided_slice %42 {offsets = [0, 96], sizes = [8, 32], strides = [1, 1]} : vector<8x128xf32> to vector<8x32xf32>
    %46 = vector.extract_strided_slice %37 {offsets = [0, 64], sizes = [8, 32], strides = [1, 1]} : vector<8x128xf32> to vector<8x32xf32>
    %47 = math.tanh %46 : vector<8x32xf32>
    %48 = arith.mulf %44, %28 : vector<8x32xf32>
    %49 = arith.mulf %43, %47 : vector<8x32xf32>
    %50 = arith.addf %48, %49 : vector<8x32xf32>
    %51 = math.tanh %50 : vector<8x32xf32>
    %52 = arith.mulf %45, %51 : vector<8x32xf32>
    %53 = vector.extract_strided_slice %52 {offsets = [4, 0], sizes = [4, 32], strides = [1, 1]} : vector<8x32xf32> to vector<4x32xf32>
    %cst_13 = arith.constant dense<0.000000e+00> : vector<8x384xf32>
    %54 = tpu.matmul %52, %6, %cst_13 {dimension_numbers = #tpu.dot_dimension_numbers<[1], [0], [0], [1], [0, 0, 1, 1], [], []>} : vector<8x32xf32>, vector<32x384xf32>, vector<8x384xf32> -> vector<8x384xf32>
    %55 = vector.extract_strided_slice %54 {offsets = [0, 0], sizes = [4, 128], strides = [1, 1]} : vector<8x384xf32> to vector<4x128xf32>
    %56 = vector.extract_strided_slice %5 {offsets = [8, 0], sizes = [4, 128], strides = [1, 1]} : vector<32x128xf32> to vector<4x128xf32>
    %57 = arith.addf %55, %56 : vector<4x128xf32>
    %58 = vector.extract_strided_slice %54 {offsets = [0, 128], sizes = [4, 128], strides = [1, 1]} : vector<8x384xf32> to vector<4x128xf32>
    %59 = vector.extract_strided_slice %54 {offsets = [4, 256], sizes = [4, 128], strides = [1, 1]} : vector<8x384xf32> to vector<4x128xf32>
    %60 = arith.addf %58, %59 : vector<4x128xf32>
    %61 = arith.addf %60, %9 : vector<4x128xf32>
    %62 = tpu.concatenate %57, %61 in 0 : vector<4x128xf32>, vector<4x128xf32> -> vector<8x128xf32>
    %63 = arith.negf %62 : vector<8x128xf32>
    %64 = math.exp %63 : vector<8x128xf32>
    %cst_14 = arith.constant 1.000000e+00 : f32
    %65 = vector.broadcast %cst_14 : f32 to vector<8x128xf32>
    %66 = arith.addf %65, %64 : vector<8x128xf32>
    %67 = arith.divf %65, %66 : vector<8x128xf32>
    %68 = vector.extract_strided_slice %67 {offsets = [0, 0], sizes = [8, 32], strides = [1, 1]} : vector<8x128xf32> to vector<8x32xf32>
    %69 = vector.extract_strided_slice %67 {offsets = [0, 32], sizes = [8, 32], strides = [1, 1]} : vector<8x128xf32> to vector<8x32xf32>
    %70 = vector.extract_strided_slice %67 {offsets = [0, 96], sizes = [8, 32], strides = [1, 1]} : vector<8x128xf32> to vector<8x32xf32>
    %71 = vector.extract_strided_slice %62 {offsets = [0, 64], sizes = [8, 32], strides = [1, 1]} : vector<8x128xf32> to vector<8x32xf32>
    %72 = math.tanh %71 : vector<8x32xf32>
    %73 = arith.mulf %69, %50 : vector<8x32xf32>
    %74 = arith.mulf %68, %72 : vector<8x32xf32>
    %75 = arith.addf %73, %74 : vector<8x32xf32>
    %76 = math.tanh %75 : vector<8x32xf32>
    %77 = arith.mulf %70, %76 : vector<8x32xf32>
    %78 = vector.extract_strided_slice %77 {offsets = [4, 0], sizes = [4, 32], strides = [1, 1]} : vector<8x32xf32> to vector<4x32xf32>
    %cst_15 = arith.constant dense<0.000000e+00> : vector<8x384xf32>
    %79 = tpu.matmul %77, %6, %cst_15 {dimension_numbers = #tpu.dot_dimension_numbers<[1], [0], [0], [1], [0, 0, 1, 1], [], []>} : vector<8x32xf32>, vector<32x384xf32>, vector<8x384xf32> -> vector<8x384xf32>
    %80 = vector.extract_strided_slice %79 {offsets = [0, 0], sizes = [4, 128], strides = [1, 1]} : vector<8x384xf32> to vector<4x128xf32>
    %81 = vector.extract_strided_slice %5 {offsets = [12, 0], sizes = [4, 128], strides = [1, 1]} : vector<32x128xf32> to vector<4x128xf32>
    %82 = arith.addf %80, %81 : vector<4x128xf32>
    %83 = vector.extract_strided_slice %79 {offsets = [0, 128], sizes = [4, 128], strides = [1, 1]} : vector<8x384xf32> to vector<4x128xf32>
    %84 = vector.extract_strided_slice %79 {offsets = [4, 256], sizes = [4, 128], strides = [1, 1]} : vector<8x384xf32> to vector<4x128xf32>
    %85 = arith.addf %83, %84 : vector<4x128xf32>
    %86 = arith.addf %85, %9 : vector<4x128xf32>
    %87 = tpu.concatenate %82, %86 in 0 : vector<4x128xf32>, vector<4x128xf32> -> vector<8x128xf32>
    %88 = arith.negf %87 : vector<8x128xf32>
    %89 = math.exp %88 : vector<8x128xf32>
    %cst_16 = arith.constant 1.000000e+00 : f32
    %90 = vector.broadcast %cst_16 : f32 to vector<8x128xf32>
    %91 = arith.addf %90, %89 : vector<8x128xf32>
    %92 = arith.divf %90, %91 : vector<8x128xf32>
    %93 = vector.extract_strided_slice %92 {offsets = [0, 0], sizes = [8, 32], strides = [1, 1]} : vector<8x128xf32> to vector<8x32xf32>
    %94 = vector.extract_strided_slice %92 {offsets = [0, 32], sizes = [8, 32], strides = [1, 1]} : vector<8x128xf32> to vector<8x32xf32>
    %95 = vector.extract_strided_slice %92 {offsets = [0, 96], sizes = [8, 32], strides = [1, 1]} : vector<8x128xf32> to vector<8x32xf32>
    %96 = vector.extract_strided_slice %87 {offsets = [0, 64], sizes = [8, 32], strides = [1, 1]} : vector<8x128xf32> to vector<8x32xf32>
    %97 = math.tanh %96 : vector<8x32xf32>
    %98 = arith.mulf %94, %75 : vector<8x32xf32>
    %99 = arith.mulf %93, %97 : vector<8x32xf32>
    %100 = arith.addf %98, %99 : vector<8x32xf32>
    %101 = math.tanh %100 : vector<8x32xf32>
    %102 = arith.mulf %95, %101 : vector<8x32xf32>
    %103 = vector.extract_strided_slice %102 {offsets = [4, 0], sizes = [4, 32], strides = [1, 1]} : vector<8x32xf32> to vector<4x32xf32>
    %cst_17 = arith.constant dense<0.000000e+00> : vector<8x384xf32>
    %104 = tpu.matmul %102, %6, %cst_17 {dimension_numbers = #tpu.dot_dimension_numbers<[1], [0], [0], [1], [0, 0, 1, 1], [], []>} : vector<8x32xf32>, vector<32x384xf32>, vector<8x384xf32> -> vector<8x384xf32>
    %105 = vector.extract_strided_slice %104 {offsets = [0, 0], sizes = [4, 128], strides = [1, 1]} : vector<8x384xf32> to vector<4x128xf32>
    %106 = vector.extract_strided_slice %5 {offsets = [16, 0], sizes = [4, 128], strides = [1, 1]} : vector<32x128xf32> to vector<4x128xf32>
    %107 = arith.addf %105, %106 : vector<4x128xf32>
    %108 = vector.extract_strided_slice %104 {offsets = [0, 128], sizes = [4, 128], strides = [1, 1]} : vector<8x384xf32> to vector<4x128xf32>
    %109 = vector.extract_strided_slice %104 {offsets = [4, 256], sizes = [4, 128], strides = [1, 1]} : vector<8x384xf32> to vector<4x128xf32>
    %110 = arith.addf %108, %109 : vector<4x128xf32>
    %111 = arith.addf %110, %9 : vector<4x128xf32>
    %112 = tpu.concatenate %107, %111 in 0 : vector<4x128xf32>, vector<4x128xf32> -> vector<8x128xf32>
    %113 = arith.negf %112 : vector<8x128xf32>
    %114 = math.exp %113 : vector<8x128xf32>
    %cst_18 = arith.constant 1.000000e+00 : f32
    %115 = vector.broadcast %cst_18 : f32 to vector<8x128xf32>
    %116 = arith.addf %115, %114 : vector<8x128xf32>
    %117 = arith.divf %115, %116 : vector<8x128xf32>
    %118 = vector.extract_strided_slice %117 {offsets = [0, 0], sizes = [8, 32], strides = [1, 1]} : vector<8x128xf32> to vector<8x32xf32>
    %119 = vector.extract_strided_slice %117 {offsets = [0, 32], sizes = [8, 32], strides = [1, 1]} : vector<8x128xf32> to vector<8x32xf32>
    %120 = vector.extract_strided_slice %117 {offsets = [0, 96], sizes = [8, 32], strides = [1, 1]} : vector<8x128xf32> to vector<8x32xf32>
    %121 = vector.extract_strided_slice %112 {offsets = [0, 64], sizes = [8, 32], strides = [1, 1]} : vector<8x128xf32> to vector<8x32xf32>
    %122 = math.tanh %121 : vector<8x32xf32>
    %123 = arith.mulf %119, %100 : vector<8x32xf32>
    %124 = arith.mulf %118, %122 : vector<8x32xf32>
    %125 = arith.addf %123, %124 : vector<8x32xf32>
    %126 = math.tanh %125 : vector<8x32xf32>
    %127 = arith.mulf %120, %126 : vector<8x32xf32>
    %128 = vector.extract_strided_slice %127 {offsets = [4, 0], sizes = [4, 32], strides = [1, 1]} : vector<8x32xf32> to vector<4x32xf32>
    %cst_19 = arith.constant dense<0.000000e+00> : vector<8x384xf32>
    %129 = tpu.matmul %127, %6, %cst_19 {dimension_numbers = #tpu.dot_dimension_numbers<[1], [0], [0], [1], [0, 0, 1, 1], [], []>} : vector<8x32xf32>, vector<32x384xf32>, vector<8x384xf32> -> vector<8x384xf32>
    %130 = vector.extract_strided_slice %129 {offsets = [0, 0], sizes = [4, 128], strides = [1, 1]} : vector<8x384xf32> to vector<4x128xf32>
    %131 = vector.extract_strided_slice %5 {offsets = [20, 0], sizes = [4, 128], strides = [1, 1]} : vector<32x128xf32> to vector<4x128xf32>
    %132 = arith.addf %130, %131 : vector<4x128xf32>
    %133 = vector.extract_strided_slice %129 {offsets = [0, 128], sizes = [4, 128], strides = [1, 1]} : vector<8x384xf32> to vector<4x128xf32>
    %134 = vector.extract_strided_slice %129 {offsets = [4, 256], sizes = [4, 128], strides = [1, 1]} : vector<8x384xf32> to vector<4x128xf32>
    %135 = arith.addf %133, %134 : vector<4x128xf32>
    %136 = arith.addf %135, %9 : vector<4x128xf32>
    %137 = tpu.concatenate %132, %136 in 0 : vector<4x128xf32>, vector<4x128xf32> -> vector<8x128xf32>
    %138 = arith.negf %137 : vector<8x128xf32>
    %139 = math.exp %138 : vector<8x128xf32>
    %cst_20 = arith.constant 1.000000e+00 : f32
    %140 = vector.broadcast %cst_20 : f32 to vector<8x128xf32>
    %141 = arith.addf %140, %139 : vector<8x128xf32>
    %142 = arith.divf %140, %141 : vector<8x128xf32>
    %143 = vector.extract_strided_slice %142 {offsets = [0, 0], sizes = [8, 32], strides = [1, 1]} : vector<8x128xf32> to vector<8x32xf32>
    %144 = vector.extract_strided_slice %142 {offsets = [0, 32], sizes = [8, 32], strides = [1, 1]} : vector<8x128xf32> to vector<8x32xf32>
    %145 = vector.extract_strided_slice %142 {offsets = [0, 96], sizes = [8, 32], strides = [1, 1]} : vector<8x128xf32> to vector<8x32xf32>
    %146 = vector.extract_strided_slice %137 {offsets = [0, 64], sizes = [8, 32], strides = [1, 1]} : vector<8x128xf32> to vector<8x32xf32>
    %147 = math.tanh %146 : vector<8x32xf32>
    %148 = arith.mulf %144, %125 : vector<8x32xf32>
    %149 = arith.mulf %143, %147 : vector<8x32xf32>
    %150 = arith.addf %148, %149 : vector<8x32xf32>
    %151 = math.tanh %150 : vector<8x32xf32>
    %152 = arith.mulf %145, %151 : vector<8x32xf32>
    %153 = vector.extract_strided_slice %152 {offsets = [4, 0], sizes = [4, 32], strides = [1, 1]} : vector<8x32xf32> to vector<4x32xf32>
    %cst_21 = arith.constant dense<0.000000e+00> : vector<8x384xf32>
    %154 = tpu.matmul %152, %6, %cst_21 {dimension_numbers = #tpu.dot_dimension_numbers<[1], [0], [0], [1], [0, 0, 1, 1], [], []>} : vector<8x32xf32>, vector<32x384xf32>, vector<8x384xf32> -> vector<8x384xf32>
    %155 = vector.extract_strided_slice %154 {offsets = [0, 0], sizes = [4, 128], strides = [1, 1]} : vector<8x384xf32> to vector<4x128xf32>
    %156 = vector.extract_strided_slice %5 {offsets = [24, 0], sizes = [4, 128], strides = [1, 1]} : vector<32x128xf32> to vector<4x128xf32>
    %157 = arith.addf %155, %156 : vector<4x128xf32>
    %158 = vector.extract_strided_slice %154 {offsets = [0, 128], sizes = [4, 128], strides = [1, 1]} : vector<8x384xf32> to vector<4x128xf32>
    %159 = vector.extract_strided_slice %154 {offsets = [4, 256], sizes = [4, 128], strides = [1, 1]} : vector<8x384xf32> to vector<4x128xf32>
    %160 = arith.addf %158, %159 : vector<4x128xf32>
    %161 = arith.addf %160, %9 : vector<4x128xf32>
    %162 = tpu.concatenate %157, %161 in 0 : vector<4x128xf32>, vector<4x128xf32> -> vector<8x128xf32>
    %163 = arith.negf %162 : vector<8x128xf32>
    %164 = math.exp %163 : vector<8x128xf32>
    %cst_22 = arith.constant 1.000000e+00 : f32
    %165 = vector.broadcast %cst_22 : f32 to vector<8x128xf32>
    %166 = arith.addf %165, %164 : vector<8x128xf32>
    %167 = arith.divf %165, %166 : vector<8x128xf32>
    %168 = vector.extract_strided_slice %167 {offsets = [0, 0], sizes = [8, 32], strides = [1, 1]} : vector<8x128xf32> to vector<8x32xf32>
    %169 = vector.extract_strided_slice %167 {offsets = [0, 32], sizes = [8, 32], strides = [1, 1]} : vector<8x128xf32> to vector<8x32xf32>
    %170 = vector.extract_strided_slice %167 {offsets = [0, 96], sizes = [8, 32], strides = [1, 1]} : vector<8x128xf32> to vector<8x32xf32>
    %171 = vector.extract_strided_slice %162 {offsets = [0, 64], sizes = [8, 32], strides = [1, 1]} : vector<8x128xf32> to vector<8x32xf32>
    %172 = math.tanh %171 : vector<8x32xf32>
    %173 = arith.mulf %169, %150 : vector<8x32xf32>
    %174 = arith.mulf %168, %172 : vector<8x32xf32>
    %175 = arith.addf %173, %174 : vector<8x32xf32>
    %176 = math.tanh %175 : vector<8x32xf32>
    %177 = arith.mulf %170, %176 : vector<8x32xf32>
    %178 = vector.extract_strided_slice %177 {offsets = [4, 0], sizes = [4, 32], strides = [1, 1]} : vector<8x32xf32> to vector<4x32xf32>
    %cst_23 = arith.constant dense<0.000000e+00> : vector<8x384xf32>
    %179 = tpu.matmul %177, %6, %cst_23 {dimension_numbers = #tpu.dot_dimension_numbers<[1], [0], [0], [1], [0, 0, 1, 1], [], []>} : vector<8x32xf32>, vector<32x384xf32>, vector<8x384xf32> -> vector<8x384xf32>
    %180 = vector.extract_strided_slice %179 {offsets = [0, 0], sizes = [4, 128], strides = [1, 1]} : vector<8x384xf32> to vector<4x128xf32>
    %181 = vector.extract_strided_slice %5 {offsets = [28, 0], sizes = [4, 128], strides = [1, 1]} : vector<32x128xf32> to vector<4x128xf32>
    %182 = arith.addf %180, %181 : vector<4x128xf32>
    %183 = vector.extract_strided_slice %179 {offsets = [0, 128], sizes = [4, 128], strides = [1, 1]} : vector<8x384xf32> to vector<4x128xf32>
    %184 = vector.extract_strided_slice %179 {offsets = [4, 256], sizes = [4, 128], strides = [1, 1]} : vector<8x384xf32> to vector<4x128xf32>
    %185 = arith.addf %183, %184 : vector<4x128xf32>
    %186 = arith.addf %185, %9 : vector<4x128xf32>
    %187 = tpu.concatenate %182, %186 in 0 : vector<4x128xf32>, vector<4x128xf32> -> vector<8x128xf32>
    %188 = arith.negf %187 : vector<8x128xf32>
    %189 = math.exp %188 : vector<8x128xf32>
    %cst_24 = arith.constant 1.000000e+00 : f32
    %190 = vector.broadcast %cst_24 : f32 to vector<8x128xf32>
    %191 = arith.addf %190, %189 : vector<8x128xf32>
    %192 = arith.divf %190, %191 : vector<8x128xf32>
    %193 = vector.extract_strided_slice %192 {offsets = [0, 0], sizes = [8, 32], strides = [1, 1]} : vector<8x128xf32> to vector<8x32xf32>
    %194 = vector.extract_strided_slice %192 {offsets = [0, 32], sizes = [8, 32], strides = [1, 1]} : vector<8x128xf32> to vector<8x32xf32>
    %195 = vector.extract_strided_slice %192 {offsets = [0, 96], sizes = [8, 32], strides = [1, 1]} : vector<8x128xf32> to vector<8x32xf32>
    %196 = vector.extract_strided_slice %187 {offsets = [0, 64], sizes = [8, 32], strides = [1, 1]} : vector<8x128xf32> to vector<8x32xf32>
    %197 = math.tanh %196 : vector<8x32xf32>
    %198 = arith.mulf %194, %175 : vector<8x32xf32>
    %199 = arith.mulf %193, %197 : vector<8x32xf32>
    %200 = arith.addf %198, %199 : vector<8x32xf32>
    %201 = math.tanh %200 : vector<8x32xf32>
    %202 = arith.mulf %195, %201 : vector<8x32xf32>
    %203 = vector.extract_strided_slice %202 {offsets = [4, 0], sizes = [4, 32], strides = [1, 1]} : vector<8x32xf32> to vector<4x32xf32>
    %cst_25 = arith.constant dense<0.000000e+00> : vector<8x384xf32>
    %204 = tpu.matmul %202, %6, %cst_25 {dimension_numbers = #tpu.dot_dimension_numbers<[1], [0], [0], [1], [0, 0, 1, 1], [], []>} : vector<8x32xf32>, vector<32x384xf32>, vector<8x384xf32> -> vector<8x384xf32>
    %205 = vector.extract_strided_slice %204 {offsets = [0, 128], sizes = [4, 128], strides = [1, 1]} : vector<8x384xf32> to vector<4x128xf32>
    %206 = vector.extract_strided_slice %204 {offsets = [4, 256], sizes = [4, 128], strides = [1, 1]} : vector<8x384xf32> to vector<4x128xf32>
    %207 = arith.addf %205, %206 : vector<4x128xf32>
    %208 = arith.addf %207, %9 : vector<4x128xf32>
    %209 = vector.extract_strided_slice %200 {offsets = [4, 0], sizes = [4, 32], strides = [1, 1]} : vector<8x32xf32> to vector<4x32xf32>
    %210 = arith.negf %208 : vector<4x128xf32>
    %211 = math.exp %210 : vector<4x128xf32>
    %cst_26 = arith.constant 1.000000e+00 : f32
    %212 = vector.broadcast %cst_26 : f32 to vector<4x128xf32>
    %213 = arith.addf %212, %211 : vector<4x128xf32>
    %214 = arith.divf %212, %213 : vector<4x128xf32>
    %215 = vector.extract_strided_slice %214 {offsets = [0, 0], sizes = [4, 32], strides = [1, 1]} : vector<4x128xf32> to vector<4x32xf32>
    %216 = vector.extract_strided_slice %214 {offsets = [0, 32], sizes = [4, 32], strides = [1, 1]} : vector<4x128xf32> to vector<4x32xf32>
    %217 = vector.extract_strided_slice %214 {offsets = [0, 96], sizes = [4, 32], strides = [1, 1]} : vector<4x128xf32> to vector<4x32xf32>
    %218 = vector.extract_strided_slice %208 {offsets = [0, 64], sizes = [4, 32], strides = [1, 1]} : vector<4x128xf32> to vector<4x32xf32>
    %219 = math.tanh %218 : vector<4x32xf32>
    %220 = arith.mulf %216, %209 : vector<4x32xf32>
    %221 = arith.mulf %215, %219 : vector<4x32xf32>
    %222 = arith.addf %220, %221 : vector<4x32xf32>
    %223 = math.tanh %222 : vector<4x32xf32>
    %224 = arith.mulf %217, %223 : vector<4x32xf32>
    %225 = tpu.concatenate %53, %78, %103, %128, %153, %178, %203, %224 in 0 : vector<4x32xf32>, vector<4x32xf32>, vector<4x32xf32>, vector<4x32xf32>, vector<4x32xf32>, vector<4x32xf32>, vector<4x32xf32>, vector<4x32xf32> -> vector<32x32xf32>
    %c0_27 = arith.constant 0 : index
    %c0_28 = arith.constant 0 : index
    %226 = vector.load %arg5[%c0_27, %c0_28] : memref<1x32xf32, #tpu.memory_space<vmem>>, vector<1x32xf32>
    %227 = vector.broadcast %226 : vector<1x32xf32> to vector<32x32xf32>
    %228 = arith.mulf %225, %227 : vector<32x32xf32>
    %cst_29 = arith.constant dense<0.000000e+00> : vector<32xf32>
    %229 = vector.multi_reduction <add>, %228, %cst_29 [1] : vector<32x32xf32> to vector<32xf32>
    %230 = vector.shape_cast %229 : vector<32xf32> to vector<32x1xf32>
    %c0_30 = arith.constant 0 : index
    %c0_31 = arith.constant 0 : index
    %231 = vector.load %arg6[%c0_30, %c0_31] : memref<32x1xf32, #tpu.memory_space<vmem>>, vector<32x1xf32>
    tpu.vector_store %arg6[%c0_30, %c0_31], %230 {strides = array<i32>} : memref<32x1xf32, #tpu.memory_space<vmem>>, vector<32x1xf32>,
    return
  }
}

</mosaic_0001>

<llo_original>
// kernel: optiver_model_forward.1
$region0: #{optiver_model_forward.1}
  #allocation0 [shape = 'u32[]', space=smem, size = 0x4, offset = 0x4, fixed_abs, tag = 'smem constant byte address 0x4 - core index']
  #allocation1 [shape = 'u32[144,128]{1,0:T(1,128)}', space=vmem, size = 0x12000, scoped, tag = 'internal scratch']
  %s0 = inlined_call_operand.vmem [shape: f32[32,12], index: 0, kind: input, shape index: {}]
  %s1 = inlined_call_operand.vmem [shape: f32[12,128], index: 1, kind: input, shape index: {}]
  %s2 = inlined_call_operand.vmem [shape: f32[1,128], index: 2, kind: input, shape index: {}]
  %s3 = inlined_call_operand.vmem [shape: f32[32,384], index: 3, kind: input, shape index: {}]
  %s4 = inlined_call_operand.vmem [shape: f32[1,128], index: 4, kind: input, shape index: {}]
  %s5 = inlined_call_operand.vmem [shape: f32[1,32], index: 5, kind: input, shape index: {}]
  %s6 = inlined_call_operand.vmem [shape: f32[32,1], index: 6, kind: output, shape index: {}]
  %s7 = sld [smem:[#allocation0]]
  $region34: #{optiver_model_forward.1} parent=0
    _
  %s9 = ssub.s32 1, %s7
  %s10 = scalar_select 0, %s9, %s7
  // Predicated region
  $region2: #{optiver_model_forward.1} parent=0 // pred_check
    _
  $region3: #{optiver_model_forward.1} parent=0 // pred_check_branch
    %12 = sbr.rel (0) target = $region5
  $region4: #{optiver_model_forward.1} parent=0 // pred_region
    _
  $region5: #{optiver_model_forward.1} parent=0 // pred_fallthru
    _
  // Predicated region
  $region6: #{optiver_model_forward.1} parent=0 // pred_check
    _
  $region7: #{optiver_model_forward.1} parent=0 // pred_check_branch
    %14 = sbr.rel (0) target = $region9
  $region8: #{optiver_model_forward.1} parent=0 // pred_region
    _
  $region9: #{optiver_model_forward.1} parent=0 // pred_fallthru
    _
  // Predicated region
  $region10: #{optiver_model_forward.1} parent=0 // pred_check
    _
  $region11: #{optiver_model_forward.1} parent=0 // pred_check_branch
    %16 = sbr.rel (0) target = $region13
  $region12: #{optiver_model_forward.1} parent=0 // pred_region
    _
  $region13: #{optiver_model_forward.1} parent=0 // pred_fallthru
    _
  // Predicated region
  $region14: #{optiver_model_forward.1} parent=0 // pred_check
    _
  $region15: #{optiver_model_forward.1} parent=0 // pred_check_branch
    %18 = sbr.rel (0) target = $region17
  $region16: #{optiver_model_forward.1} parent=0 // pred_region
    _
  $region17: #{optiver_model_forward.1} parent=0 // pred_fallthru
    _
  // Predicated region
  $region18: #{optiver_model_forward.1} parent=0 // pred_check
    _
  $region19: #{optiver_model_forward.1} parent=0 // pred_check_branch
    %20 = sbr.rel (0) target = $region21
  $region20: #{optiver_model_forward.1} parent=0 // pred_region
    _
  $region21: #{optiver_model_forward.1} parent=0 // pred_fallthru
    _
  // Predicated region
  $region22: #{optiver_model_forward.1} parent=0 // pred_check
    _
  $region23: #{optiver_model_forward.1} parent=0 // pred_check_branch
    %22 = sbr.rel (0) target = $region25
  $region24: #{optiver_model_forward.1} parent=0 // pred_region
    _
  $region25: #{optiver_model_forward.1} parent=0 // pred_fallthru
    _
  %v23 = vld [vmem:[%s0] sm:$0xff]
  %v24 = vld [vmem:[%s0 + $0x8] sm:$0xff]
  %v25 = vld [vmem:[%s0 + $0x10] sm:$0xff]
  %v26 = vld [vmem:[%s0 + $0x18] sm:$0xff]
  %v27 = vld [vmem:[%s1] sm:$0xff]
  %v28 = vld [vmem:[%s1 + $0x8] sm:$0xf]
  %v29 = vld [vmem:[%s2] sm:$0x1]
  %v31 = vlaneseq
  %v32 = vshrl.u32 %v31, 7
  %v33 = vsub.s32 0, %v32
  %v34 = vrot.slane %v29, %v33
  %vm36 = vcmask 97280
  %v38 = vsel %vm36, %v23, 0
  %v41 = vsel %vm36, %v24, 0
  %v44 = vsel %vm36, %v25, 0
  %v47 = vsel %vm36, %v26, 0
  %vm49 = vcmask 1043456
  %v51 = vsel %vm49, %v28, 0
  %53 = vmatprep.subr.mxu0 0.0
  %54 = vmatpush1.msra.mxu0 0.0
  %55 = vmatprep.subr.mxu0 0.0
  %56 = vmatpush1.msra.mxu0 0.0
  %57 = vmatprep.subr.mxu0 0.0
  %58 = vmatpush1.msra.mxu0 0.0
  %59 = vmatprep.subr.mxu0 0.0
  %60 = vmatpush1.msra.mxu0 0.0
  %61 = vmatprep.subr.mxu0 0.0
  %62 = vmatpush1.msra.mxu0 0.0
  %63 = vmatprep.subr.mxu0 0.0
  %64 = vmatpush1.msra.mxu0 0.0
  %65 = vmatprep.subr.mxu0 0.0
  %66 = vmatpush1.msra.mxu0 0.0
  %67 = vmatprep.subr.mxu0 0.0
  %68 = vmatpush1.msra.mxu0 0.0
  %69 = vmatprep.subr.mxu0 0.0
  %70 = vmatpush1.msra.mxu0 0.0
  %71 = vmatprep.subr.mxu0 0.0
  %72 = vmatpush1.msra.mxu0 0.0
  %73 = vmatprep.subr.mxu0 0.0
  %74 = vmatpush1.msra.mxu0 0.0
  %75 = vmatprep.subr.mxu0 0.0
  %76 = vmatpush1.msra.mxu0 0.0
  %77 = vmatprep.subr.mxu0 0.0
  %78 = vmatpush1.msra.mxu0 0.0
  %79 = vmatprep.subr.mxu0 0.0
  %80 = vmatpush1.msra.mxu0 0.0
  %81 = vmatprep.subr.mxu0 0.0
  %82 = vmatpush1.msra.mxu0 %v51
  %83 = vmatprep.subr.mxu0 0.0
  %84 = vmatpush1.msra.mxu0 %v27
  %85 = vmatprep.subr.mxu0 0.0
  %86 = vmatpush2.msra.mxu0 0.0
  %87 = vmatprep.subr.mxu0 0.0
  %88 = vmatpush2.msra.mxu0 0.0
  %89 = vmatprep.subr.mxu0 0.0
  %90 = vmatpush2.msra.mxu0 0.0
  %91 = vmatprep.subr.mxu0 0.0
  %92 = vmatpush2.msra.mxu0 0.0
  %93 = vmatprep.subr.mxu0 0.0
  %94 = vmatpush2.msra.mxu0 0.0
  %95 = vmatprep.subr.mxu0 0.0
  %96 = vmatpush2.msra.mxu0 0.0
  %97 = vmatprep.subr.mxu0 0.0
  %98 = vmatpush2.msra.mxu0 0.0
  %99 = vmatprep.subr.mxu0 0.0
  %100 = vmatpush2.msra.mxu0 0.0
  %101 = vmatprep.subr.mxu0 0.0
  %102 = vmatpush2.msra.mxu0 0.0
  %103 = vmatprep.subr.mxu0 0.0
  %104 = vmatpush2.msra.mxu0 0.0
  %105 = vmatprep.subr.mxu0 0.0
  %106 = vmatpush2.msra.mxu0 0.0
  %107 = vmatprep.subr.mxu0 0.0
  %108 = vmatpush2.msra.mxu0 0.0
  %109 = vmatprep.subr.mxu0 0.0
  %110 = vmatpush2.msra.mxu0 0.0
  %111 = vmatprep.subr.mxu0 0.0
  %112 = vmatpush2.msra.mxu0 0.0
  %113 = vmatprep.subr.mxu0 0.0
  %114 = vmatpush2.msra.mxu0 0.0
  %115 = vmatprep.subr.mxu0 0.0
  %116 = vmatpush2.msra.mxu0 0.0
  %117 = vmatprep.mubr.f32.mxu0 0.0
  %118 = vmatmul.mubr.f32.gmra.mxu0 %v38
  %v119 = vpop.f32.mrf.mxu0
  %v120 = vadd.f32 %v34, %v119
  %v121 = vpop.f32.mrf.mxu0
  %122 = vmatprep.mubr.f32.mxu0 0.0
  %123 = vmatmul.mubr.f32.gmra.mxu0 %v41
  %v124 = vpop.f32.mrf.mxu0
  %v125 = vadd.f32 %v34, %v124
  %v126 = vpop.f32.mrf.mxu0
  %127 = vmatprep.mubr.f32.mxu0 0.0
  %128 = vmatmul.mubr.f32.gmra.mxu0 %v44
  %v129 = vpop.f32.mrf.mxu0
  %v130 = vadd.f32 %v34, %v129
  %v131 = vpop.f32.mrf.mxu0
  %132 = vmatprep.mubr.f32.mxu0 0.0
  %133 = vmatmul.mubr.f32.gmra.mxu0 %v47
  %v134 = vpop.f32.mrf.mxu0
  %v135 = vadd.f32 %v34, %v134
  %v136 = vpop.f32.mrf.mxu0
  %137 = vdwg.mxu0
  %v138 = vld [vmem:[%s3] sm:$0xff]
  %v139 = vld [vmem:[%s3 + $0x8] sm:$0xff]
  %v140 = vld [vmem:[%s3 + $0x10] sm:$0xff]
  %v141 = vld [vmem:[%s3 + $0x18] sm:$0xff]
  %v142 = vld [vmem:[%s3 + $0x20] sm:$0xff]
  %v143 = vld [vmem:[%s3 + $0x28] sm:$0xff]
  %v144 = vld [vmem:[%s3 + $0x30] sm:$0xff]
  %v145 = vld [vmem:[%s3 + $0x38] sm:$0xff]
  %v146 = vld [vmem:[%s3 + $0x40] sm:$0xff]
  %v147 = vld [vmem:[%s3 + $0x48] sm:$0xff]
  %v148 = vld [vmem:[%s3 + $0x50] sm:$0xff]
  %v149 = vld [vmem:[%s3 + $0x58] sm:$0xff]
  %v150 = vld [vmem:[%s4] sm:$0x1]
  %v152 = vlaneseq
  %v153 = vshrl.u32 %v152, 7
  %v154 = vsub.s32 0, %v153
  %v155 = vrot.slane %v150, %v154
  %v157 = vxor.u32 %v120, 2147483648
  %v158 = vmul.f32 %v157, 1.442695
  %v159 = vpow.pop %v158
  %v160 = vadd.f32 %v159, 1.0
  %v161 = vrcp.pop %v160
  %v162 = vmul.f32 1.0, %v161
  %v163 = vtanh.pop %v120
  %v164 = vmul.f32 %v162, 0.0
  %166 = vrot.lane.b32.xlu0 %v163, 64
  %v167 = vpop.permute.xlu0 %166
  %v169 = vmul.f32 %v162, %v167
  %171 = vrot.lane.b32.xlu0 %v169, 32
  %v172 = vpop.permute.xlu0 %171
  %v174 = vadd.f32 %v164, %v172
  %v175 = vtanh.pop %v174
  %177 = vrot.lane.b32.xlu0 %v175, 64
  %v178 = vpop.permute.xlu0 %177
  %v180 = vmul.f32 %v162, %v178
  %v181 = vsel %vm49, %v180, 0.0
  %v182 = vsel %vm49, %v174, 0.0
  %184 = vrot.lane.b32.xlu0 %v181, 32
  %v185 = vpop.permute.xlu0 %184
  %vm186 = vcmask 261120
  %v187 = vsel %vm186, %v185, 0
  %189 = vmatprep.subr.mxu0 0.0
  %190 = vmatpush1.msra.mxu0 0.0
  %191 = vmatprep.subr.mxu0 0.0
  %192 = vmatpush1.msra.mxu0 0.0
  %193 = vmatprep.subr.mxu0 0.0
  %194 = vmatpush1.msra.mxu0 0.0
  %195 = vmatprep.subr.mxu0 0.0
  %196 = vmatpush1.msra.mxu0 0.0
  %197 = vmatprep.subr.mxu0 0.0
  %198 = vmatpush1.msra.mxu0 0.0
  %199 = vmatprep.subr.mxu0 0.0
  %200 = vmatpush1.msra.mxu0 0.0
  %201 = vmatprep.subr.mxu0 0.0
  %202 = vmatpush1.msra.mxu0 0.0
  %203 = vmatprep.subr.mxu0 0.0
  %204 = vmatpush1.msra.mxu0 0.0
  %205 = vmatprep.subr.mxu0 0.0
  %206 = vmatpush1.msra.mxu0 0.0
  %207 = vmatprep.subr.mxu0 0.0
  %208 = vmatpush1.msra.mxu0 0.0
  %209 = vmatprep.subr.mxu0 0.0
  %210 = vmatpush1.msra.mxu0 0.0
  %211 = vmatprep.subr.mxu0 0.0
  %212 = vmatpush1.msra.mxu0 0.0
  %213 = vmatprep.subr.mxu0 %v148
  %214 = vmatpush1.msra.mxu0 %v147
  %215 = vmatprep.subr.mxu0 %v145
  %216 = vmatpush1.msra.mxu0 %v144
  %217 = vmatprep.subr.mxu0 %v142
  %218 = vmatpush1.msra.mxu0 %v141
  %219 = vmatprep.subr.mxu0 %v139
  %220 = vmatpush1.msra.mxu0 %v138
  %221 = vmatprep.subr.mxu0 0.0
  %222 = vmatpush2.msra.mxu0 0.0
  %223 = vmatprep.subr.mxu0 0.0
  %224 = vmatpush2.msra.mxu0 0.0
  %225 = vmatprep.subr.mxu0 0.0
  %226 = vmatpush2.msra.mxu0 0.0
  %227 = vmatprep.subr.mxu0 0.0
  %228 = vmatpush2.msra.mxu0 0.0
  %229 = vmatprep.subr.mxu0 0.0
  %230 = vmatpush2.msra.mxu0 0.0
  %231 = vmatprep.subr.mxu0 0.0
  %232 = vmatpush2.msra.mxu0 0.0
  %233 = vmatprep.subr.mxu0 0.0
  %234 = vmatpush2.msra.mxu0 0.0
  %235 = vmatprep.subr.mxu0 0.0
  %236 = vmatpush2.msra.mxu0 0.0
  %237 = vmatprep.subr.mxu0 0.0
  %238 = vmatpush2.msra.mxu0 0.0
  %239 = vmatprep.subr.mxu0 0.0
  %240 = vmatpush2.msra.mxu0 0.0
  %241 = vmatprep.subr.mxu0 0.0
  %242 = vmatpush2.msra.mxu0 0.0
  %243 = vmatprep.subr.mxu0 0.0
  %244 = vmatpush2.msra.mxu0 0.0
  %245 = vmatprep.subr.mxu0 0.0
  %246 = vmatpush2.msra.mxu0 0.0
  %247 = vmatprep.subr.mxu0 0.0
  %248 = vmatpush2.msra.mxu0 0.0
  %249 = vmatprep.subr.mxu0 0.0
  %250 = vmatpush2.msra.mxu0 0.0
  %251 = vmatprep.subr.mxu0 0.0
  %252 = vmatpush2.msra.mxu0 0.0
  %253 = vmatprep.mubr.f32.mxu0 0.0
  %254 = vmatmul.mubr.f32.gmra.mxu0 %v187
  %v255 = vpop.f32.mrf.mxu0
  %v256 = vadd.f32 0.0, %v255
  %v257 = vpop.f32.mrf.mxu0
  %v258 = vadd.f32 0.0, %v257
  %259 = vdwg.mxu0
  %260 = vmatprep.subr.mxu0 0.0
  %261 = vmatpush1.msra.mxu0 0.0
  %262 = vmatprep.subr.mxu0 0.0
  %263 = vmatpush1.msra.mxu0 0.0
  %264 = vmatprep.subr.mxu0 0.0
  %265 = vmatpush1.msra.mxu0 0.0
  %266 = vmatprep.subr.mxu0 0.0
  %267 = vmatpush1.msra.mxu0 0.0
  %268 = vmatprep.subr.mxu0 0.0
  %269 = vmatpush1.msra.mxu0 0.0
  %270 = vmatprep.subr.mxu0 0.0
  %271 = vmatpush1.msra.mxu0 0.0
  %272 = vmatprep.subr.mxu0 0.0
  %273 = vmatpush1.msra.mxu0 0.0
  %274 = vmatprep.subr.mxu0 0.0
  %275 = vmatpush1.msra.mxu0 0.0
  %276 = vmatprep.subr.mxu0 0.0
  %277 = vmatpush1.msra.mxu0 0.0
  %278 = vmatprep.subr.mxu0 0.0
  %279 = vmatpush1.msra.mxu0 0.0
  %280 = vmatprep.subr.mxu0 0.0
  %281 = vmatpush1.msra.mxu0 0.0
  %282 = vmatprep.subr.mxu0 0.0
  %283 = vmatpush1.msra.mxu0 0.0
  %284 = vmatprep.subr.mxu0 0.0
  %285 = vmatpush1.msra.mxu0 %v149
  %286 = vmatprep.subr.mxu0 0.0
  %287 = vmatpush1.msra.mxu0 %v146
  %288 = vmatprep.subr.mxu0 0.0
  %289 = vmatpush1.msra.mxu0 %v143
  %290 = vmatprep.subr.mxu0 0.0
  %291 = vmatpush1.msra.mxu0 %v140
  %292 = vmatprep.subr.mxu0 0.0
  %293 = vmatpush2.msra.mxu0 0.0
  %294 = vmatprep.subr.mxu0 0.0
  %295 = vmatpush2.msra.mxu0 0.0
  %296 = vmatprep.subr.mxu0 0.0
  %297 = vmatpush2.msra.mxu0 0.0
  %298 = vmatprep.subr.mxu0 0.0
  %299 = vmatpush2.msra.mxu0 0.0
  %300 = vmatprep.subr.mxu0 0.0
  %301 = vmatpush2.msra.mxu0 0.0
  %302 = vmatprep.subr.mxu0 0.0
  %303 = vmatpush2.msra.mxu0 0.0
  %304 = vmatprep.subr.mxu0 0.0
  %305 = vmatpush2.msra.mxu0 0.0
  %306 = vmatprep.subr.mxu0 0.0
  %307 = vmatpush2.msra.mxu0 0.0
  %308 = vmatprep.subr.mxu0 0.0
  %309 = vmatpush2.msra.mxu0 0.0
  %310 = vmatprep.subr.mxu0 0.0
  %311 = vmatpush2.msra.mxu0 0.0
  %312 = vmatprep.subr.mxu0 0.0
  %313 = vmatpush2.msra.mxu0 0.0
  %314 = vmatprep.subr.mxu0 0.0
  %315 = vmatpush2.msra.mxu0 0.0
  %316 = vmatprep.subr.mxu0 0.0
  %317 = vmatpush2.msra.mxu0 0.0
  %318 = vmatprep.subr.mxu0 0.0
  %319 = vmatpush2.msra.mxu0 0.0
  %320 = vmatprep.subr.mxu0 0.0
  %321 = vmatpush2.msra.mxu0 0.0
  %322 = vmatprep.subr.mxu0 0.0
  %323 = vmatpush2.msra.mxu0 0.0
  %324 = vmatprep.mubr.f32.mxu0 0.0
  %325 = vmatmul.mubr.f32.gmra.mxu0 %v187
  %v326 = vpop.f32.mrf.mxu0
  %v327 = vadd.f32 0.0, %v326
  %v328 = vpop.f32.mrf.mxu0
  %329 = vdwg.mxu0
  %v331 = vrot.slane %v120, 4
  %v333 = vadd.f32 %v256, %v331
  %v335 = vrot.slane %v327, 4
  %v337 = vadd.f32 %v258, %v335
  %v338 = vadd.f32 %v337, %v155
  %v340 = vrot.slane %v338, 4
  %v342 = vsel %vm49, %v333, %v340
  %v343 = vxor.u32 %v342, 2147483648
  %v344 = vmul.f32 %v343, 1.442695
  %v345 = vpow.pop %v344
  %v346 = vadd.f32 %v345, 1.0
  %v347 = vrcp.pop %v346
  %v348 = vmul.f32 1.0, %v347
  %v349 = vtanh.pop %v342
  %v350 = vmul.f32 %v348, %v182
  %352 = vrot.lane.b32.xlu0 %v349, 64
  %v353 = vpop.permute.xlu0 %352
  %v355 = vmul.f32 %v348, %v353
  %357 = vrot.lane.b32.xlu0 %v355, 32
  %v358 = vpop.permute.xlu0 %357
  %v360 = vadd.f32 %v350, %v358
  %v361 = vtanh.pop %v360
  %363 = vrot.lane.b32.xlu0 %v361, 64
  %v364 = vpop.permute.xlu0 %363
  %v366 = vmul.f32 %v348, %v364
  %368 = vrot.lane.b32.xlu0 %v366, 32
  %v369 = vpop.permute.xlu0 %368
  %v370 = vsel %vm186, %v369, 0
  %372 = vmatprep.subr.mxu0 0.0
  %373 = vmatpush1.msra.mxu0 0.0
  %374 = vmatprep.subr.mxu0 0.0
  %375 = vmatpush1.msra.mxu0 0.0
  %376 = vmatprep.subr.mxu0 0.0
  %377 = vmatpush1.msra.mxu0 0.0
  %378 = vmatprep.subr.mxu0 0.0
  %379 = vmatpush1.msra.mxu0 0.0
  %380 = vmatprep.subr.mxu0 0.0
  %381 = vmatpush1.msra.mxu0 0.0
  %382 = vmatprep.subr.mxu0 0.0
  %383 = vmatpush1.msra.mxu0 0.0
  %384 = vmatprep.subr.mxu0 0.0
  %385 = vmatpush1.msra.mxu0 0.0
  %386 = vmatprep.subr.mxu0 0.0
  %387 = vmatpush1.msra.mxu0 0.0
  %388 = vmatprep.subr.mxu0 0.0
  %389 = vmatpush1.msra.mxu0 0.0
  %390 = vmatprep.subr.mxu0 0.0
  %391 = vmatpush1.msra.mxu0 0.0
  %392 = vmatprep.subr.mxu0 0.0
  %393 = vmatpush1.msra.mxu0 0.0
  %394 = vmatprep.subr.mxu0 0.0
  %395 = vmatpush1.msra.mxu0 0.0
  %396 = vmatprep.subr.mxu0 %v148
  %397 = vmatpush1.msra.mxu0 %v147
  %398 = vmatprep.subr.mxu0 %v145
  %399 = vmatpush1.msra.mxu0 %v144
  %400 = vmatprep.subr.mxu0 %v142
  %401 = vmatpush1.msra.mxu0 %v141
  %402 = vmatprep.subr.mxu0 %v139
  %403 = vmatpush1.msra.mxu0 %v138
  %404 = vmatprep.subr.mxu0 0.0
  %405 = vmatpush2.msra.mxu0 0.0
  %406 = vmatprep.subr.mxu0 0.0
  %407 = vmatpush2.msra.mxu0 0.0
  %408 = vmatprep.subr.mxu0 0.0
  %409 = vmatpush2.msra.mxu0 0.0
  %410 = vmatprep.subr.mxu0 0.0
  %411 = vmatpush2.msra.mxu0 0.0
  %412 = vmatprep.subr.mxu0 0.0
  %413 = vmatpush2.msra.mxu0 0.0
  %414 = vmatprep.subr.mxu0 0.0
  %415 = vmatpush2.msra.mxu0 0.0
  %416 = vmatprep.subr.mxu0 0.0
  %417 = vmatpush2.msra.mxu0 0.0
  %418 = vmatprep.subr.mxu0 0.0
  %419 = vmatpush2.msra.mxu0 0.0
  %420 = vmatprep.subr.mxu0 0.0
  %421 = vmatpush2.msra.mxu0 0.0
  %422 = vmatprep.subr.mxu0 0.0
  %423 = vmatpush2.msra.mxu0 0.0
  %424 = vmatprep.subr.mxu0 0.0
  %425 = vmatpush2.msra.mxu0 0.0
  %426 = vmatprep.subr.mxu0 0.0
  %427 = vmatpush2.msra.mxu0 0.0
  %428 = vmatprep.subr.mxu0 0.0
  %429 = vmatpush2.msra.mxu0 0.0
  %430 = vmatprep.subr.mxu0 0.0
  %431 = vmatpush2.msra.mxu0 0.0
  %432 = vmatprep.subr.mxu0 0.0
  %433 = vmatpush2.msra.mxu0 0.0
  %434 = vmatprep.subr.mxu0 0.0
  %435 = vmatpush2.msra.mxu0 0.0
  %436 = vmatprep.mubr.f32.mxu0 0.0
  %437 = vmatmul.mubr.f32.gmra.mxu0 %v370
  %v438 = vpop.f32.mrf.mxu0
  %v439 = vadd.f32 0.0, %v438
  %v440 = vpop.f32.mrf.mxu0
  %v441 = vadd.f32 0.0, %v440
  %442 = vdwg.mxu0
  %443 = vmatprep.subr.mxu0 0.0
  %444 = vmatpush1.msra.mxu0 0.0
  %445 = vmatprep.subr.mxu0 0.0
  %446 = vmatpush1.msra.mxu0 0.0
  %447 = vmatprep.subr.mxu0 0.0
  %448 = vmatpush1.msra.mxu0 0.0
  %449 = vmatprep.subr.mxu0 0.0
  %450 = vmatpush1.msra.mxu0 0.0
  %451 = vmatprep.subr.mxu0 0.0
  %452 = vmatpush1.msra.mxu0 0.0
  %453 = vmatprep.subr.mxu0 0.0
  %454 = vmatpush1.msra.mxu0 0.0
  %455 = vmatprep.subr.mxu0 0.0
  %456 = vmatpush1.msra.mxu0 0.0
  %457 = vmatprep.subr.mxu0 0.0
  %458 = vmatpush1.msra.mxu0 0.0
  %459 = vmatprep.subr.mxu0 0.0
  %460 = vmatpush1.msra.mxu0 0.0
  %461 = vmatprep.subr.mxu0 0.0
  %462 = vmatpush1.msra.mxu0 0.0
  %463 = vmatprep.subr.mxu0 0.0
  %464 = vmatpush1.msra.mxu0 0.0
  %465 = vmatprep.subr.mxu0 0.0
  %466 = vmatpush1.msra.mxu0 0.0
  %467 = vmatprep.subr.mxu0 0.0
  %468 = vmatpush1.msra.mxu0 %v149
  %469 = vmatprep.subr.mxu0 0.0
  %470 = vmatpush1.msra.mxu0 %v146
  %471 = vmatprep.subr.mxu0 0.0
  %472 = vmatpush1.msra.mxu0 %v143
  %473 = vmatprep.subr.mxu0 0.0
  %474 = vmatpush1.msra.mxu0 %v140
  %475 = vmatprep.subr.mxu0 0.0
  %476 = vmatpush2.msra.mxu0 0.0
  %477 = vmatprep.subr.mxu0 0.0
  %478 = vmatpush2.msra.mxu0 0.0
  %479 = vmatprep.subr.mxu0 0.0
  %480 = vmatpush2.msra.mxu0 0.0
  %481 = vmatprep.subr.mxu0 0.0
  %482 = vmatpush2.msra.mxu0 0.0
  %483 = vmatprep.subr.mxu0 0.0
  %484 = vmatpush2.msra.mxu0 0.0
  %485 = vmatprep.subr.mxu0 0.0
  %486 = vmatpush2.msra.mxu0 0.0
  %487 = vmatprep.subr.mxu0 0.0
  %488 = vmatpush2.msra.mxu0 0.0
  %489 = vmatprep.subr.mxu0 0.0
  %490 = vmatpush2.msra.mxu0 0.0
  %491 = vmatprep.subr.mxu0 0.0
  %492 = vmatpush2.msra.mxu0 0.0
  %493 = vmatprep.subr.mxu0 0.0
  %494 = vmatpush2.msra.mxu0 0.0
  %495 = vmatprep.subr.mxu0 0.0
  %496 = vmatpush2.msra.mxu0 0.0
  %497 = vmatprep.subr.mxu0 0.0
  %498 = vmatpush2.msra.mxu0 0.0
  %499 = vmatprep.subr.mxu0 0.0
  %500 = vmatpush2.msra.mxu0 0.0
  %501 = vmatprep.subr.mxu0 0.0
  %502 = vmatpush2.msra.mxu0 0.0
  %503 = vmatprep.subr.mxu0 0.0
  %504 = vmatpush2.msra.mxu0 0.0
  %505 = vmatprep.subr.mxu0 0.0
  %506 = vmatpush2.msra.mxu0 0.0
  %507 = vmatprep.mubr.f32.mxu0 0.0
  %508 = vmatmul.mubr.f32.gmra.mxu0 %v370
  %v509 = vpop.f32.mrf.mxu0
  %v510 = vadd.f32 0.0, %v509
  %v511 = vpop.f32.mrf.mxu0
  %512 = vdwg.mxu0
  %v513 = vadd.f32 %v439, %v125
  %v515 = vrot.slane %v510, 4
  %v517 = vadd.f32 %v441, %v515
  %v518 = vadd.f32 %v517, %v155
  %v520 = vrot.slane %v518, 4
  %v522 = vsel %vm49, %v513, %v520
  %v523 = vxor.u32 %v522, 2147483648
  %v524 = vmul.f32 %v523, 1.442695
  %v525 = vpow.pop %v524
  %v526 = vadd.f32 %v525, 1.0
  %v527 = vrcp.pop %v526
  %v528 = vmul.f32 1.0, %v527
  %v529 = vtanh.pop %v522
  %v530 = vmul.f32 %v528, %v360
  %532 = vrot.lane.b32.xlu0 %v529, 64
  %v533 = vpop.permute.xlu0 %532
  %v535 = vmul.f32 %v528, %v533
  %537 = vrot.lane.b32.xlu0 %v535, 32
  %v538 = vpop.permute.xlu0 %537
  %v540 = vadd.f32 %v530, %v538
  %v541 = vtanh.pop %v540
  %543 = vrot.lane.b32.xlu0 %v541, 64
  %v544 = vpop.permute.xlu0 %543
  %v546 = vmul.f32 %v528, %v544
  %548 = vrot.lane.b32.xlu0 %v546, 32
  %v549 = vpop.permute.xlu0 %548
  %v550 = vsel %vm186, %v549, 0
  %552 = vmatprep.subr.mxu0 0.0
  %553 = vmatpush1.msra.mxu0 0.0
  %554 = vmatprep.subr.mxu0 0.0
  %555 = vmatpush1.msra.mxu0 0.0
  %556 = vmatprep.subr.mxu0 0.0
  %557 = vmatpush1.msra.mxu0 0.0
  %558 = vmatprep.subr.mxu0 0.0
  %559 = vmatpush1.msra.mxu0 0.0
  %560 = vmatprep.subr.mxu0 0.0
  %561 = vmatpush1.msra.mxu0 0.0
  %562 = vmatprep.subr.mxu0 0.0
  %563 = vmatpush1.msra.mxu0 0.0
  %564 = vmatprep.subr.mxu0 0.0
  %565 = vmatpush1.msra.mxu0 0.0
  %566 = vmatprep.subr.mxu0 0.0
  %567 = vmatpush1.msra.mxu0 0.0
  %568 = vmatprep.subr.mxu0 0.0
  %569 = vmatpush1.msra.mxu0 0.0
  %570 = vmatprep.subr.mxu0 0.0
  %571 = vmatpush1.msra.mxu0 0.0
  %572 = vmatprep.subr.mxu0 0.0
  %573 = vmatpush1.msra.mxu0 0.0
  %574 = vmatprep.subr.mxu0 0.0
  %575 = vmatpush1.msra.mxu0 0.0
  %576 = vmatprep.subr.mxu0 %v148
  %577 = vmatpush1.msra.mxu0 %v147
  %578 = vmatprep.subr.mxu0 %v145
  %579 = vmatpush1.msra.mxu0 %v144
  %580 = vmatprep.subr.mxu0 %v142
  %581 = vmatpush1.msra.mxu0 %v141
  %582 = vmatprep.subr.mxu0 %v139
  %583 = vmatpush1.msra.mxu0 %v138
  %584 = vmatprep.subr.mxu0 0.0
  %585 = vmatpush2.msra.mxu0 0.0
  %586 = vmatprep.subr.mxu0 0.0
  %587 = vmatpush2.msra.mxu0 0.0
  %588 = vmatprep.subr.mxu0 0.0
  %589 = vmatpush2.msra.mxu0 0.0
  %590 = vmatprep.subr.mxu0 0.0
  %591 = vmatpush2.msra.mxu0 0.0
  %592 = vmatprep.subr.mxu0 0.0
  %593 = vmatpush2.msra.mxu0 0.0
  %594 = vmatprep.subr.mxu0 0.0
  %595 = vmatpush2.msra.mxu0 0.0
  %596 = vmatprep.subr.mxu0 0.0
  %597 = vmatpush2.msra.mxu0 0.0
  %598 = vmatprep.subr.mxu0 0.0
  %599 = vmatpush2.msra.mxu0 0.0
  %600 = vmatprep.subr.mxu0 0.0
  %601 = vmatpush2.msra.mxu0 0.0
  %602 = vmatprep.subr.mxu0 0.0
  %603 = vmatpush2.msra.mxu0 0.0
  %604 = vmatprep.subr.mxu0 0.0
  %605 = vmatpush2.msra.mxu0 0.0
  %606 = vmatprep.subr.mxu0 0.0
  %607 = vmatpush2.msra.mxu0 0.0
  %608 = vmatprep.subr.mxu0 0.0
  %609 = vmatpush2.msra.mxu0 0.0
  %610 = vmatprep.subr.mxu0 0.0
  %611 = vmatpush2.msra.mxu0 0.0
  %612 = vmatprep.subr.mxu0 0.0
  %613 = vmatpush2.msra.mxu0 0.0
  %614 = vmatprep.subr.mxu0 0.0
  %615 = vmatpush2.msra.mxu0 0.0
  %616 = vmatprep.mubr.f32.mxu0 0.0
  %617 = vmatmul.mubr.f32.gmra.mxu0 %v550
  %v618 = vpop.f32.mrf.mxu0
  %v619 = vadd.f32 0.0, %v618
  %v620 = vpop.f32.mrf.mxu0
  %v621 = vadd.f32 0.0, %v620
  %622 = vdwg.mxu0
  %623 = vmatprep.subr.mxu0 0.0
  %624 = vmatpush1.msra.mxu0 0.0
  %625 = vmatprep.subr.mxu0 0.0
  %626 = vmatpush1.msra.mxu0 0.0
  %627 = vmatprep.subr.mxu0 0.0
  %628 = vmatpush1.msra.mxu0 0.0
  %629 = vmatprep.subr.mxu0 0.0
  %630 = vmatpush1.msra.mxu0 0.0
  %631 = vmatprep.subr.mxu0 0.0
  %632 = vmatpush1.msra.mxu0 0.0
  %633 = vmatprep.subr.mxu0 0.0
  %634 = vmatpush1.msra.mxu0 0.0
  %635 = vmatprep.subr.mxu0 0.0
  %636 = vmatpush1.msra.mxu0 0.0
  %637 = vmatprep.subr.mxu0 0.0
  %638 = vmatpush1.msra.mxu0 0.0
  %639 = vmatprep.subr.mxu0 0.0
  %640 = vmatpush1.msra.mxu0 0.0
  %641 = vmatprep.subr.mxu0 0.0
  %642 = vmatpush1.msra.mxu0 0.0
  %643 = vmatprep.subr.mxu0 0.0
  %644 = vmatpush1.msra.mxu0 0.0
  %645 = vmatprep.subr.mxu0 0.0
  %646 = vmatpush1.msra.mxu0 0.0
  %647 = vmatprep.subr.mxu0 0.0
  %648 = vmatpush1.msra.mxu0 %v149
  %649 = vmatprep.subr.mxu0 0.0
  %650 = vmatpush1.msra.mxu0 %v146
  %651 = vmatprep.subr.mxu0 0.0
  %652 = vmatpush1.msra.mxu0 %v143
  %653 = vmatprep.subr.mxu0 0.0
  %654 = vmatpush1.msra.mxu0 %v140
  %655 = vmatprep.subr.mxu0 0.0
  %656 = vmatpush2.msra.mxu0 0.0
  %657 = vmatprep.subr.mxu0 0.0
  %658 = vmatpush2.msra.mxu0 0.0
  %659 = vmatprep.subr.mxu0 0.0
  %660 = vmatpush2.msra.mxu0 0.0
  %661 = vmatprep.subr.mxu0 0.0
  %662 = vmatpush2.msra.mxu0 0.0
  %663 = vmatprep.subr.mxu0 0.0
  %664 = vmatpush2.msra.mxu0 0.0
  %665 = vmatprep.subr.mxu0 0.0
  %666 = vmatpush2.msra.mxu0 0.0
  %667 = vmatprep.subr.mxu0 0.0
  %668 = vmatpush2.msra.mxu0 0.0
  %669 = vmatprep.subr.mxu0 0.0
  %670 = vmatpush2.msra.mxu0 0.0
  %671 = vmatprep.subr.mxu0 0.0
  %672 = vmatpush2.msra.mxu0 0.0
  %673 = vmatprep.subr.mxu0 0.0
  %674 = vmatpush2.msra.mxu0 0.0
  %675 = vmatprep.subr.mxu0 0.0
  %676 = vmatpush2.msra.mxu0 0.0
  %677 = vmatprep.subr.mxu0 0.0
  %678 = vmatpush2.msra.mxu0 0.0
  %679 = vmatprep.subr.mxu0 0.0
  %680 = vmatpush2.msra.mxu0 0.0
  %681 = vmatprep.subr.mxu0 0.0
  %682 = vmatpush2.msra.mxu0 0.0
  %683 = vmatprep.subr.mxu0 0.0
  %684 = vmatpush2.msra.mxu0 0.0
  %685 = vmatprep.subr.mxu0 0.0
  %686 = vmatpush2.msra.mxu0 0.0
  %687 = vmatprep.mubr.f32.mxu0 0.0
  %688 = vmatmul.mubr.f32.gmra.mxu0 %v550
  %v689 = vpop.f32.mrf.mxu0
  %v690 = vadd.f32 0.0, %v689
  %v691 = vpop.f32.mrf.mxu0
  %692 = vdwg.mxu0
  %v694 = vrot.slane %v125, 4
  %v696 = vadd.f32 %v619, %v694
  %v698 = vrot.slane %v690, 4
  %v700 = vadd.f32 %v621, %v698
  %v701 = vadd.f32 %v700, %v155
  %v703 = vrot.slane %v701, 4
  %v705 = vsel %vm49, %v696, %v703
  %v706 = vxor.u32 %v705, 2147483648
  %v707 = vmul.f32 %v706, 1.442695
  %v708 = vpow.pop %v707
  %v709 = vadd.f32 %v708, 1.0
  %v710 = vrcp.pop %v709
  %v711 = vmul.f32 1.0, %v710
  %v712 = vtanh.pop %v705
  %v713 = vmul.f32 %v711, %v540
  %715 = vrot.lane.b32.xlu0 %v712, 64
  %v716 = vpop.permute.xlu0 %715
  %v718 = vmul.f32 %v711, %v716
  %720 = vrot.lane.b32.xlu0 %v718, 32
  %v721 = vpop.permute.xlu0 %720
  %v723 = vadd.f32 %v713, %v721
  %v724 = vtanh.pop %v723
  %726 = vrot.lane.b32.xlu0 %v724, 64
  %v727 = vpop.permute.xlu0 %726
  %v729 = vmul.f32 %v711, %v727
  %731 = vrot.lane.b32.xlu0 %v729, 32
  %v732 = vpop.permute.xlu0 %731
  %v733 = vsel %vm186, %v732, 0
  %735 = vmatprep.subr.mxu0 0.0
  %736 = vmatpush1.msra.mxu0 0.0
  %737 = vmatprep.subr.mxu0 0.0
  %738 = vmatpush1.msra.mxu0 0.0
  %739 = vmatprep.subr.mxu0 0.0
  %740 = vmatpush1.msra.mxu0 0.0
  %741 = vmatprep.subr.mxu0 0.0
  %742 = vmatpush1.msra.mxu0 0.0
  %743 = vmatprep.subr.mxu0 0.0
  %744 = vmatpush1.msra.mxu0 0.0
  %745 = vmatprep.subr.mxu0 0.0
  %746 = vmatpush1.msra.mxu0 0.0
  %747 = vmatprep.subr.mxu0 0.0
  %748 = vmatpush1.msra.mxu0 0.0
  %749 = vmatprep.subr.mxu0 0.0
  %750 = vmatpush1.msra.mxu0 0.0
  %751 = vmatprep.subr.mxu0 0.0
  %752 = vmatpush1.msra.mxu0 0.0
  %753 = vmatprep.subr.mxu0 0.0
  %754 = vmatpush1.msra.mxu0 0.0
  %755 = vmatprep.subr.mxu0 0.0
  %756 = vmatpush1.msra.mxu0 0.0
  %757 = vmatprep.subr.mxu0 0.0
  %758 = vmatpush1.msra.mxu0 0.0
  %759 = vmatprep.subr.mxu0 %v148
  %760 = vmatpush1.msra.mxu0 %v147
  %761 = vmatprep.subr.mxu0 %v145
  %762 = vmatpush1.msra.mxu0 %v144
  %763 = vmatprep.subr.mxu0 %v142
  %764 = vmatpush1.msra.mxu0 %v141
  %765 = vmatprep.subr.mxu0 %v139
  %766 = vmatpush1.msra.mxu0 %v138
  %767 = vmatprep.subr.mxu0 0.0
  %768 = vmatpush2.msra.mxu0 0.0
  %769 = vmatprep.subr.mxu0 0.0
  %770 = vmatpush2.msra.mxu0 0.0
  %771 = vmatprep.subr.mxu0 0.0
  %772 = vmatpush2.msra.mxu0 0.0
  %773 = vmatprep.subr.mxu0 0.0
  %774 = vmatpush2.msra.mxu0 0.0
  %775 = vmatprep.subr.mxu0 0.0
  %776 = vmatpush2.msra.mxu0 0.0
  %777 = vmatprep.subr.mxu0 0.0
  %778 = vmatpush2.msra.mxu0 0.0
  %779 = vmatprep.subr.mxu0 0.0
  %780 = vmatpush2.msra.mxu0 0.0
  %781 = vmatprep.subr.mxu0 0.0
  %782 = vmatpush2.msra.mxu0 0.0
  %783 = vmatprep.subr.mxu0 0.0
  %784 = vmatpush2.msra.mxu0 0.0
  %785 = vmatprep.subr.mxu0 0.0
  %786 = vmatpush2.msra.mxu0 0.0
  %787 = vmatprep.subr.mxu0 0.0
  %788 = vmatpush2.msra.mxu0 0.0
  %789 = vmatprep.subr.mxu0 0.0
  %790 = vmatpush2.msra.mxu0 0.0
  %791 = vmatprep.subr.mxu0 0.0
  %792 = vmatpush2.msra.mxu0 0.0
  %793 = vmatprep.subr.mxu0 0.0
  %794 = vmatpush2.msra.mxu0 0.0
  %795 = vmatprep.subr.mxu0 0.0
  %796 = vmatpush2.msra.mxu0 0.0
  %797 = vmatprep.subr.mxu0 0.0
  %798 = vmatpush2.msra.mxu0 0.0
  %799 = vmatprep.mubr.f32.mxu0 0.0
  %800 = vmatmul.mubr.f32.gmra.mxu0 %v733
  %v801 = vpop.f32.mrf.mxu0
  %v802 = vadd.f32 0.0, %v801
  %v803 = vpop.f32.mrf.mxu0
  %v804 = vadd.f32 0.0, %v803
  %805 = vdwg.mxu0
  %806 = vmatprep.subr.mxu0 0.0
  %807 = vmatpush1.msra.mxu0 0.0
  %808 = vmatprep.subr.mxu0 0.0
  %809 = vmatpush1.msra.mxu0 0.0
  %810 = vmatprep.subr.mxu0 0.0
  %811 = vmatpush1.msra.mxu0 0.0
  %812 = vmatprep.subr.mxu0 0.0
  %813 = vmatpush1.msra.mxu0 0.0
  %814 = vmatprep.subr.mxu0 0.0
  %815 = vmatpush1.msra.mxu0 0.0
  %816 = vmatprep.subr.mxu0 0.0
  %817 = vmatpush1.msra.mxu0 0.0
  %818 = vmatprep.subr.mxu0 0.0
  %819 = vmatpush1.msra.mxu0 0.0
  %820 = vmatprep.subr.mxu0 0.0
  %821 = vmatpush1.msra.mxu0 0.0
  %822 = vmatprep.subr.mxu0 0.0
  %823 = vmatpush1.msra.mxu0 0.0
  %824 = vmatprep.subr.mxu0 0.0
  %825 = vmatpush1.msra.mxu0 0.0
  %826 = vmatprep.subr.mxu0 0.0
  %827 = vmatpush1.msra.mxu0 0.0
  %828 = vmatprep.subr.mxu0 0.0
  %829 = vmatpush1.msra.mxu0 0.0
  %830 = vmatprep.subr.mxu0 0.0
  %831 = vmatpush1.msra.mxu0 %v149
  %832 = vmatprep.subr.mxu0 0.0
  %833 = vmatpush1.msra.mxu0 %v146
  %834 = vmatprep.subr.mxu0 0.0
  %835 = vmatpush1.msra.mxu0 %v143
  %836 = vmatprep.subr.mxu0 0.0
  %837 = vmatpush1.msra.mxu0 %v140
  %838 = vmatprep.subr.mxu0 0.0
  %839 = vmatpush2.msra.mxu0 0.0
  %840 = vmatprep.subr.mxu0 0.0
  %841 = vmatpush2.msra.mxu0 0.0
  %842 = vmatprep.subr.mxu0 0.0
  %843 = vmatpush2.msra.mxu0 0.0
  %844 = vmatprep.subr.mxu0 0.0
  %845 = vmatpush2.msra.mxu0 0.0
  %846 = vmatprep.subr.mxu0 0.0
  %847 = vmatpush2.msra.mxu0 0.0
  %848 = vmatprep.subr.mxu0 0.0
  %849 = vmatpush2.msra.mxu0 0.0
  %850 = vmatprep.subr.mxu0 0.0
  %851 = vmatpush2.msra.mxu0 0.0
  %852 = vmatprep.subr.mxu0 0.0
  %853 = vmatpush2.msra.mxu0 0.0
  %854 = vmatprep.subr.mxu0 0.0
  %855 = vmatpush2.msra.mxu0 0.0
  %856 = vmatprep.subr.mxu0 0.0
  %857 = vmatpush2.msra.mxu0 0.0
  %858 = vmatprep.subr.mxu0 0.0
  %859 = vmatpush2.msra.mxu0 0.0
  %860 = vmatprep.subr.mxu0 0.0
  %861 = vmatpush2.msra.mxu0 0.0
  %862 = vmatprep.subr.mxu0 0.0
  %863 = vmatpush2.msra.mxu0 0.0
  %864 = vmatprep.subr.mxu0 0.0
  %865 = vmatpush2.msra.mxu0 0.0
  %866 = vmatprep.subr.mxu0 0.0
  %867 = vmatpush2.msra.mxu0 0.0
  %868 = vmatprep.subr.mxu0 0.0
  %869 = vmatpush2.msra.mxu0 0.0
  %870 = vmatprep.mubr.f32.mxu0 0.0
  %871 = vmatmul.mubr.f32.gmra.mxu0 %v733
  %v872 = vpop.f32.mrf.mxu0
  %v873 = vadd.f32 0.0, %v872
  %v874 = vpop.f32.mrf.mxu0
  %875 = vdwg.mxu0
  %v876 = vadd.f32 %v802, %v130
  %v878 = vrot.slane %v873, 4
  %v880 = vadd.f32 %v804, %v878
  %v881 = vadd.f32 %v880, %v155
  %v883 = vrot.slane %v881, 4
  %v885 = vsel %vm49, %v876, %v883
  %v886 = vxor.u32 %v885, 2147483648
  %v887 = vmul.f32 %v886, 1.442695
  %v888 = vpow.pop %v887
  %v889 = vadd.f32 %v888, 1.0
  %v890 = vrcp.pop %v889
  %v891 = vmul.f32 1.0, %v890
  %v892 = vtanh.pop %v885
  %v893 = vmul.f32 %v891, %v723
  %895 = vrot.lane.b32.xlu0 %v892, 64
  %v896 = vpop.permute.xlu0 %895
  %v898 = vmul.f32 %v891, %v896
  %900 = vrot.lane.b32.xlu0 %v898, 32
  %v901 = vpop.permute.xlu0 %900
  %v903 = vadd.f32 %v893, %v901
  %v904 = vtanh.pop %v903
  %906 = vrot.lane.b32.xlu0 %v904, 64
  %v907 = vpop.permute.xlu0 %906
  %v909 = vmul.f32 %v891, %v907
  %911 = vrot.lane.b32.xlu0 %v909, 32
  %v912 = vpop.permute.xlu0 %911
  %v913 = vsel %vm186, %v912, 0
  %915 = vmatprep.subr.mxu0 0.0
  %916 = vmatpush1.msra.mxu0 0.0
  %917 = vmatprep.subr.mxu0 0.0
  %918 = vmatpush1.msra.mxu0 0.0
  %919 = vmatprep.subr.mxu0 0.0
  %920 = vmatpush1.msra.mxu0 0.0
  %921 = vmatprep.subr.mxu0 0.0
  %922 = vmatpush1.msra.mxu0 0.0
  %923 = vmatprep.subr.mxu0 0.0
  %924 = vmatpush1.msra.mxu0 0.0
  %925 = vmatprep.subr.mxu0 0.0
  %926 = vmatpush1.msra.mxu0 0.0
  %927 = vmatprep.subr.mxu0 0.0
  %928 = vmatpush1.msra.mxu0 0.0
  %929 = vmatprep.subr.mxu0 0.0
  %930 = vmatpush1.msra.mxu0 0.0
  %931 = vmatprep.subr.mxu0 0.0
  %932 = vmatpush1.msra.mxu0 0.0
  %933 = vmatprep.subr.mxu0 0.0
  %934 = vmatpush1.msra.mxu0 0.0
  %935 = vmatprep.subr.mxu0 0.0
  %936 = vmatpush1.msra.mxu0 0.0
  %937 = vmatprep.subr.mxu0 0.0
  %938 = vmatpush1.msra.mxu0 0.0
  %939 = vmatprep.subr.mxu0 %v148
  %940 = vmatpush1.msra.mxu0 %v147
  %941 = vmatprep.subr.mxu0 %v145
  %942 = vmatpush1.msra.mxu0 %v144
  %943 = vmatprep.subr.mxu0 %v142
  %944 = vmatpush1.msra.mxu0 %v141
  %945 = vmatprep.subr.mxu0 %v139
  %946 = vmatpush1.msra.mxu0 %v138
  %947 = vmatprep.subr.mxu0 0.0
  %948 = vmatpush2.msra.mxu0 0.0
  %949 = vmatprep.subr.mxu0 0.0
  %950 = vmatpush2.msra.mxu0 0.0
  %951 = vmatprep.subr.mxu0 0.0
  %952 = vmatpush2.msra.mxu0 0.0
  %953 = vmatprep.subr.mxu0 0.0
  %954 = vmatpush2.msra.mxu0 0.0
  %955 = vmatprep.subr.mxu0 0.0
  %956 = vmatpush2.msra.mxu0 0.0
  %957 = vmatprep.subr.mxu0 0.0
  %958 = vmatpush2.msra.mxu0 0.0
  %959 = vmatprep.subr.mxu0 0.0
  %960 = vmatpush2.msra.mxu0 0.0
  %961 = vmatprep.subr.mxu0 0.0
  %962 = vmatpush2.msra.mxu0 0.0
  %963 = vmatprep.subr.mxu0 0.0
  %964 = vmatpush2.msra.mxu0 0.0
  %965 = vmatprep.subr.mxu0 0.0
  %966 = vmatpush2.msra.mxu0 0.0
  %967 = vmatprep.subr.mxu0 0.0
  %968 = vmatpush2.msra.mxu0 0.0
  %969 = vmatprep.subr.mxu0 0.0
  %970 = vmatpush2.msra.mxu0 0.0
  %971 = vmatprep.subr.mxu0 0.0
  %972 = vmatpush2.msra.mxu0 0.0
  %973 = vmatprep.subr.mxu0 0.0
  %974 = vmatpush2.msra.mxu0 0.0
  %975 = vmatprep.subr.mxu0 0.0
  %976 = vmatpush2.msra.mxu0 0.0
  %977 = vmatprep.subr.mxu0 0.0
  %978 = vmatpush2.msra.mxu0 0.0
  %979 = vmatprep.mubr.f32.mxu0 0.0
  %980 = vmatmul.mubr.f32.gmra.mxu0 %v913
  %v981 = vpop.f32.mrf.mxu0
  %v982 = vadd.f32 0.0, %v981
  %v983 = vpop.f32.mrf.mxu0
  %v984 = vadd.f32 0.0, %v983
  %985 = vdwg.mxu0
  %986 = vmatprep.subr.mxu0 0.0
  %987 = vmatpush1.msra.mxu0 0.0
  %988 = vmatprep.subr.mxu0 0.0
  %989 = vmatpush1.msra.mxu0 0.0
  %990 = vmatprep.subr.mxu0 0.0
  %991 = vmatpush1.msra.mxu0 0.0
  %992 = vmatprep.subr.mxu0 0.0
  %993 = vmatpush1.msra.mxu0 0.0
  %994 = vmatprep.subr.mxu0 0.0
  %995 = vmatpush1.msra.mxu0 0.0
  %996 = vmatprep.subr.mxu0 0.0
  %997 = vmatpush1.msra.mxu0 0.0
  %998 = vmatprep.subr.mxu0 0.0
  %999 = vmatpush1.msra.mxu0 0.0
  %1000 = vmatprep.subr.mxu0 0.0
  %1001 = vmatpush1.msra.mxu0 0.0
  %1002 = vmatprep.subr.mxu0 0.0
  %1003 = vmatpush1.msra.mxu0 0.0
  %1004 = vmatprep.subr.mxu0 0.0
  %1005 = vmatpush1.msra.mxu0 0.0
  %1006 = vmatprep.subr.mxu0 0.0
  %1007 = vmatpush1.msra.mxu0 0.0
  %1008 = vmatprep.subr.mxu0 0.0
  %1009 = vmatpush1.msra.mxu0 0.0
  %1010 = vmatprep.subr.mxu0 0.0
  %1011 = vmatpush1.msra.mxu0 %v149
  %1012 = vmatprep.subr.mxu0 0.0
  %1013 = vmatpush1.msra.mxu0 %v146
  %1014 = vmatprep.subr.mxu0 0.0
  %1015 = vmatpush1.msra.mxu0 %v143
  %1016 = vmatprep.subr.mxu0 0.0
  %1017 = vmatpush1.msra.mxu0 %v140
  %1018 = vmatprep.subr.mxu0 0.0
  %1019 = vmatpush2.msra.mxu0 0.0
  %1020 = vmatprep.subr.mxu0 0.0
  %1021 = vmatpush2.msra.mxu0 0.0
  %1022 = vmatprep.subr.mxu0 0.0
  %1023 = vmatpush2.msra.mxu0 0.0
  %1024 = vmatprep.subr.mxu0 0.0
  %1025 = vmatpush2.msra.mxu0 0.0
  %1026 = vmatprep.subr.mxu0 0.0
  %1027 = vmatpush2.msra.mxu0 0.0
  %1028 = vmatprep.subr.mxu0 0.0
  %1029 = vmatpush2.msra.mxu0 0.0
  %1030 = vmatprep.subr.mxu0 0.0
  %1031 = vmatpush2.msra.mxu0 0.0
  %1032 = vmatprep.subr.mxu0 0.0
  %1033 = vmatpush2.msra.mxu0 0.0
  %1034 = vmatprep.subr.mxu0 0.0
  %1035 = vmatpush2.msra.mxu0 0.0
  %1036 = vmatprep.subr.mxu0 0.0
  %1037 = vmatpush2.msra.mxu0 0.0
  %1038 = vmatprep.subr.mxu0 0.0
  %1039 = vmatpush2.msra.mxu0 0.0
  %1040 = vmatprep.subr.mxu0 0.0
  %1041 = vmatpush2.msra.mxu0 0.0
  %1042 = vmatprep.subr.mxu0 0.0
  %1043 = vmatpush2.msra.mxu0 0.0
  %1044 = vmatprep.subr.mxu0 0.0
  %1045 = vmatpush2.msra.mxu0 0.0
  %1046 = vmatprep.subr.mxu0 0.0
  %1047 = vmatpush2.msra.mxu0 0.0
  %1048 = vmatprep.subr.mxu0 0.0
  %1049 = vmatpush2.msra.mxu0 0.0
  %1050 = vmatprep.mubr.f32.mxu0 0.0
  %1051 = vmatmul.mubr.f32.gmra.mxu0 %v913
  %v1052 = vpop.f32.mrf.mxu0
  %v1053 = vadd.f32 0.0, %v1052
  %v1054 = vpop.f32.mrf.mxu0
  %1055 = vdwg.mxu0
  %v1057 = vrot.slane %v130, 4
  %v1059 = vadd.f32 %v982, %v1057
  %v1061 = vrot.slane %v1053, 4
  %v1063 = vadd.f32 %v984, %v1061
  %v1064 = vadd.f32 %v1063, %v155
  %v1066 = vrot.slane %v1064, 4
  %v1068 = vsel %vm49, %v1059, %v1066
  %v1069 = vxor.u32 %v1068, 2147483648
  %v1070 = vmul.f32 %v1069, 1.442695
  %v1071 = vpow.pop %v1070
  %v1072 = vadd.f32 %v1071, 1.0
  %v1073 = vrcp.pop %v1072
  %v1074 = vmul.f32 1.0, %v1073
  %v1075 = vtanh.pop %v1068
  %v1076 = vmul.f32 %v1074, %v903
  %1078 = vrot.lane.b32.xlu0 %v1075, 64
  %v1079 = vpop.permute.xlu0 %1078
  %v1081 = vmul.f32 %v1074, %v1079
  %1083 = vrot.lane.b32.xlu0 %v1081, 32
  %v1084 = vpop.permute.xlu0 %1083
  %v1086 = vadd.f32 %v1076, %v1084
  %v1087 = vtanh.pop %v1086
  %1089 = vrot.lane.b32.xlu0 %v1087, 64
  %v1090 = vpop.permute.xlu0 %1089
  %v1092 = vmul.f32 %v1074, %v1090
  %1094 = vrot.lane.b32.xlu0 %v1092, 32
  %v1095 = vpop.permute.xlu0 %1094
  %v1096 = vsel %vm186, %v1095, 0
  %1098 = vmatprep.subr.mxu0 0.0
  %1099 = vmatpush1.msra.mxu0 0.0
  %1100 = vmatprep.subr.mxu0 0.0
  %1101 = vmatpush1.msra.mxu0 0.0
  %1102 = vmatprep.subr.mxu0 0.0
  %1103 = vmatpush1.msra.mxu0 0.0
  %1104 = vmatprep.subr.mxu0 0.0
  %1105 = vmatpush1.msra.mxu0 0.0
  %1106 = vmatprep.subr.mxu0 0.0
  %1107 = vmatpush1.msra.mxu0 0.0
  %1108 = vmatprep.subr.mxu0 0.0
  %1109 = vmatpush1.msra.mxu0 0.0
  %1110 = vmatprep.subr.mxu0 0.0
  %1111 = vmatpush1.msra.mxu0 0.0
  %1112 = vmatprep.subr.mxu0 0.0
  %1113 = vmatpush1.msra.mxu0 0.0
  %1114 = vmatprep.subr.mxu0 0.0
  %1115 = vmatpush1.msra.mxu0 0.0
  %1116 = vmatprep.subr.mxu0 0.0
  %1117 = vmatpush1.msra.mxu0 0.0
  %1118 = vmatprep.subr.mxu0 0.0
  %1119 = vmatpush1.msra.mxu0 0.0
  %1120 = vmatprep.subr.mxu0 0.0
  %1121 = vmatpush1.msra.mxu0 0.0
  %1122 = vmatprep.subr.mxu0 %v148
  %1123 = vmatpush1.msra.mxu0 %v147
  %1124 = vmatprep.subr.mxu0 %v145
  %1125 = vmatpush1.msra.mxu0 %v144
  %1126 = vmatprep.subr.mxu0 %v142
  %1127 = vmatpush1.msra.mxu0 %v141
  %1128 = vmatprep.subr.mxu0 %v139
  %1129 = vmatpush1.msra.mxu0 %v138
  %1130 = vmatprep.subr.mxu0 0.0
  %1131 = vmatpush2.msra.mxu0 0.0
  %1132 = vmatprep.subr.mxu0 0.0
  %1133 = vmatpush2.msra.mxu0 0.0
  %1134 = vmatprep.subr.mxu0 0.0
  %1135 = vmatpush2.msra.mxu0 0.0
  %1136 = vmatprep.subr.mxu0 0.0
  %1137 = vmatpush2.msra.mxu0 0.0
  %1138 = vmatprep.subr.mxu0 0.0
  %1139 = vmatpush2.msra.mxu0 0.0
  %1140 = vmatprep.subr.mxu0 0.0
  %1141 = vmatpush2.msra.mxu0 0.0
  %1142 = vmatprep.subr.mxu0 0.0
  %1143 = vmatpush2.msra.mxu0 0.0
  %1144 = vmatprep.subr.mxu0 0.0
  %1145 = vmatpush2.msra.mxu0 0.0
  %1146 = vmatprep.subr.mxu0 0.0
  %1147 = vmatpush2.msra.mxu0 0.0
  %1148 = vmatprep.subr.mxu0 0.0
  %1149 = vmatpush2.msra.mxu0 0.0
  %1150 = vmatprep.subr.mxu0 0.0
  %1151 = vmatpush2.msra.mxu0 0.0
  %1152 = vmatprep.subr.mxu0 0.0
  %1153 = vmatpush2.msra.mxu0 0.0
  %1154 = vmatprep.subr.mxu0 0.0
  %1155 = vmatpush2.msra.mxu0 0.0
  %1156 = vmatprep.subr.mxu0 0.0
  %1157 = vmatpush2.msra.mxu0 0.0
  %1158 = vmatprep.subr.mxu0 0.0
  %1159 = vmatpush2.msra.mxu0 0.0
  %1160 = vmatprep.subr.mxu0 0.0
  %1161 = vmatpush2.msra.mxu0 0.0
  %1162 = vmatprep.mubr.f32.mxu0 0.0
  %1163 = vmatmul.mubr.f32.gmra.mxu0 %v1096
  %v1164 = vpop.f32.mrf.mxu0
  %v1165 = vadd.f32 0.0, %v1164
  %v1166 = vpop.f32.mrf.mxu0
  %v1167 = vadd.f32 0.0, %v1166
  %1168 = vdwg.mxu0
  %1169 = vmatprep.subr.mxu0 0.0
  %1170 = vmatpush1.msra.mxu0 0.0
  %1171 = vmatprep.subr.mxu0 0.0
  %1172 = vmatpush1.msra.mxu0 0.0
  %1173 = vmatprep.subr.mxu0 0.0
  %1174 = vmatpush1.msra.mxu0 0.0
  %1175 = vmatprep.subr.mxu0 0.0
  %1176 = vmatpush1.msra.mxu0 0.0
  %1177 = vmatprep.subr.mxu0 0.0
  %1178 = vmatpush1.msra.mxu0 0.0
  %1179 = vmatprep.subr.mxu0 0.0
  %1180 = vmatpush1.msra.mxu0 0.0
  %1181 = vmatprep.subr.mxu0 0.0
  %1182 = vmatpush1.msra.mxu0 0.0
  %1183 = vmatprep.subr.mxu0 0.0
  %1184 = vmatpush1.msra.mxu0 0.0
  %1185 = vmatprep.subr.mxu0 0.0
  %1186 = vmatpush1.msra.mxu0 0.0
  %1187 = vmatprep.subr.mxu0 0.0
  %1188 = vmatpush1.msra.mxu0 0.0
  %1189 = vmatprep.subr.mxu0 0.0
  %1190 = vmatpush1.msra.mxu0 0.0
  %1191 = vmatprep.subr.mxu0 0.0
  %1192 = vmatpush1.msra.mxu0 0.0
  %1193 = vmatprep.subr.mxu0 0.0
  %1194 = vmatpush1.msra.mxu0 %v149
  %1195 = vmatprep.subr.mxu0 0.0
  %1196 = vmatpush1.msra.mxu0 %v146
  %1197 = vmatprep.subr.mxu0 0.0
  %1198 = vmatpush1.msra.mxu0 %v143
  %1199 = vmatprep.subr.mxu0 0.0
  %1200 = vmatpush1.msra.mxu0 %v140
  %1201 = vmatprep.subr.mxu0 0.0
  %1202 = vmatpush2.msra.mxu0 0.0
  %1203 = vmatprep.subr.mxu0 0.0
  %1204 = vmatpush2.msra.mxu0 0.0
  %1205 = vmatprep.subr.mxu0 0.0
  %1206 = vmatpush2.msra.mxu0 0.0
  %1207 = vmatprep.subr.mxu0 0.0
  %1208 = vmatpush2.msra.mxu0 0.0
  %1209 = vmatprep.subr.mxu0 0.0
  %1210 = vmatpush2.msra.mxu0 0.0
  %1211 = vmatprep.subr.mxu0 0.0
  %1212 = vmatpush2.msra.mxu0 0.0
  %1213 = vmatprep.subr.mxu0 0.0
  %1214 = vmatpush2.msra.mxu0 0.0
  %1215 = vmatprep.subr.mxu0 0.0
  %1216 = vmatpush2.msra.mxu0 0.0
  %1217 = vmatprep.subr.mxu0 0.0
  %1218 = vmatpush2.msra.mxu0 0.0
  %1219 = vmatprep.subr.mxu0 0.0
  %1220 = vmatpush2.msra.mxu0 0.0
  %1221 = vmatprep.subr.mxu0 0.0
  %1222 = vmatpush2.msra.mxu0 0.0
  %1223 = vmatprep.subr.mxu0 0.0
  %1224 = vmatpush2.msra.mxu0 0.0
  %1225 = vmatprep.subr.mxu0 0.0
  %1226 = vmatpush2.msra.mxu0 0.0
  %1227 = vmatprep.subr.mxu0 0.0
  %1228 = vmatpush2.msra.mxu0 0.0
  %1229 = vmatprep.subr.mxu0 0.0
  %1230 = vmatpush2.msra.mxu0 0.0
  %1231 = vmatprep.subr.mxu0 0.0
  %1232 = vmatpush2.msra.mxu0 0.0
  %1233 = vmatprep.mubr.f32.mxu0 0.0
  %1234 = vmatmul.mubr.f32.gmra.mxu0 %v1096
  %v1235 = vpop.f32.mrf.mxu0
  %v1236 = vadd.f32 0.0, %v1235
  %v1237 = vpop.f32.mrf.mxu0
  %1238 = vdwg.mxu0
  %v1239 = vadd.f32 %v1165, %v135
  %v1241 = vrot.slane %v1236, 4
  %v1243 = vadd.f32 %v1167, %v1241
  %v1244 = vadd.f32 %v1243, %v155
  %v1246 = vrot.slane %v1244, 4
  %v1248 = vsel %vm49, %v1239, %v1246
  %v1249 = vxor.u32 %v1248, 2147483648
  %v1250 = vmul.f32 %v1249, 1.442695
  %v1251 = vpow.pop %v1250
  %v1252 = vadd.f32 %v1251, 1.0
  %v1253 = vrcp.pop %v1252
  %v1254 = vmul.f32 1.0, %v1253
  %v1255 = vtanh.pop %v1248
  %v1256 = vmul.f32 %v1254, %v1086
  %1258 = vrot.lane.b32.xlu0 %v1255, 64
  %v1259 = vpop.permute.xlu0 %1258
  %v1261 = vmul.f32 %v1254, %v1259
  %1263 = vrot.lane.b32.xlu0 %v1261, 32
  %v1264 = vpop.permute.xlu0 %1263
  %v1266 = vadd.f32 %v1256, %v1264
  %v1267 = vtanh.pop %v1266
  %1269 = vrot.lane.b32.xlu0 %v1267, 64
  %v1270 = vpop.permute.xlu0 %1269
  %v1272 = vmul.f32 %v1254, %v1270
  %1274 = vrot.lane.b32.xlu0 %v1272, 32
  %v1275 = vpop.permute.xlu0 %1274
  %v1276 = vsel %vm186, %v1275, 0
  %1278 = vmatprep.subr.mxu0 0.0
  %1279 = vmatpush1.msra.mxu0 0.0
  %1280 = vmatprep.subr.mxu0 0.0
  %1281 = vmatpush1.msra.mxu0 0.0
  %1282 = vmatprep.subr.mxu0 0.0
  %1283 = vmatpush1.msra.mxu0 0.0
  %1284 = vmatprep.subr.mxu0 0.0
  %1285 = vmatpush1.msra.mxu0 0.0
  %1286 = vmatprep.subr.mxu0 0.0
  %1287 = vmatpush1.msra.mxu0 0.0
  %1288 = vmatprep.subr.mxu0 0.0
  %1289 = vmatpush1.msra.mxu0 0.0
  %1290 = vmatprep.subr.mxu0 0.0
  %1291 = vmatpush1.msra.mxu0 0.0
  %1292 = vmatprep.subr.mxu0 0.0
  %1293 = vmatpush1.msra.mxu0 0.0
  %1294 = vmatprep.subr.mxu0 0.0
  %1295 = vmatpush1.msra.mxu0 0.0
  %1296 = vmatprep.subr.mxu0 0.0
  %1297 = vmatpush1.msra.mxu0 0.0
  %1298 = vmatprep.subr.mxu0 0.0
  %1299 = vmatpush1.msra.mxu0 0.0
  %1300 = vmatprep.subr.mxu0 0.0
  %1301 = vmatpush1.msra.mxu0 0.0
  %1302 = vmatprep.subr.mxu0 %v148
  %1303 = vmatpush1.msra.mxu0 %v147
  %1304 = vmatprep.subr.mxu0 %v145
  %1305 = vmatpush1.msra.mxu0 %v144
  %1306 = vmatprep.subr.mxu0 %v142
  %1307 = vmatpush1.msra.mxu0 %v141
  %1308 = vmatprep.subr.mxu0 %v139
  %1309 = vmatpush1.msra.mxu0 %v138
  %1310 = vmatprep.subr.mxu0 0.0
  %1311 = vmatpush2.msra.mxu0 0.0
  %1312 = vmatprep.subr.mxu0 0.0
  %1313 = vmatpush2.msra.mxu0 0.0
  %1314 = vmatprep.subr.mxu0 0.0
  %1315 = vmatpush2.msra.mxu0 0.0
  %1316 = vmatprep.subr.mxu0 0.0
  %1317 = vmatpush2.msra.mxu0 0.0
  %1318 = vmatprep.subr.mxu0 0.0
  %1319 = vmatpush2.msra.mxu0 0.0
  %1320 = vmatprep.subr.mxu0 0.0
  %1321 = vmatpush2.msra.mxu0 0.0
  %1322 = vmatprep.subr.mxu0 0.0
  %1323 = vmatpush2.msra.mxu0 0.0
  %1324 = vmatprep.subr.mxu0 0.0
  %1325 = vmatpush2.msra.mxu0 0.0
  %1326 = vmatprep.subr.mxu0 0.0
  %1327 = vmatpush2.msra.mxu0 0.0
  %1328 = vmatprep.subr.mxu0 0.0
  %1329 = vmatpush2.msra.mxu0 0.0
  %1330 = vmatprep.subr.mxu0 0.0
  %1331 = vmatpush2.msra.mxu0 0.0
  %1332 = vmatprep.subr.mxu0 0.0
  %1333 = vmatpush2.msra.mxu0 0.0
  %1334 = vmatprep.subr.mxu0 0.0
  %1335 = vmatpush2.msra.mxu0 0.0
  %1336 = vmatprep.subr.mxu0 0.0
  %1337 = vmatpush2.msra.mxu0 0.0
  %1338 = vmatprep.subr.mxu0 0.0
  %1339 = vmatpush2.msra.mxu0 0.0
  %1340 = vmatprep.subr.mxu0 0.0
  %1341 = vmatpush2.msra.mxu0 0.0
  %1342 = vmatprep.mubr.f32.mxu0 0.0
  %1343 = vmatmul.mubr.f32.gmra.mxu0 %v1276
  %v1344 = vpop.f32.mrf.mxu0
  %v1345 = vadd.f32 0.0, %v1344
  %v1346 = vpop.f32.mrf.mxu0
  %v1347 = vadd.f32 0.0, %v1346
  %1348 = vdwg.mxu0
  %1349 = vmatprep.subr.mxu0 0.0
  %1350 = vmatpush1.msra.mxu0 0.0
  %1351 = vmatprep.subr.mxu0 0.0
  %1352 = vmatpush1.msra.mxu0 0.0
  %1353 = vmatprep.subr.mxu0 0.0
  %1354 = vmatpush1.msra.mxu0 0.0
  %1355 = vmatprep.subr.mxu0 0.0
  %1356 = vmatpush1.msra.mxu0 0.0
  %1357 = vmatprep.subr.mxu0 0.0
  %1358 = vmatpush1.msra.mxu0 0.0
  %1359 = vmatprep.subr.mxu0 0.0
  %1360 = vmatpush1.msra.mxu0 0.0
  %1361 = vmatprep.subr.mxu0 0.0
  %1362 = vmatpush1.msra.mxu0 0.0
  %1363 = vmatprep.subr.mxu0 0.0
  %1364 = vmatpush1.msra.mxu0 0.0
  %1365 = vmatprep.subr.mxu0 0.0
  %1366 = vmatpush1.msra.mxu0 0.0
  %1367 = vmatprep.subr.mxu0 0.0
  %1368 = vmatpush1.msra.mxu0 0.0
  %1369 = vmatprep.subr.mxu0 0.0
  %1370 = vmatpush1.msra.mxu0 0.0
  %1371 = vmatprep.subr.mxu0 0.0
  %1372 = vmatpush1.msra.mxu0 0.0
  %1373 = vmatprep.subr.mxu0 0.0
  %1374 = vmatpush1.msra.mxu0 %v149
  %1375 = vmatprep.subr.mxu0 0.0
  %1376 = vmatpush1.msra.mxu0 %v146
  %1377 = vmatprep.subr.mxu0 0.0
  %1378 = vmatpush1.msra.mxu0 %v143
  %1379 = vmatprep.subr.mxu0 0.0
  %1380 = vmatpush1.msra.mxu0 %v140
  %1381 = vmatprep.subr.mxu0 0.0
  %1382 = vmatpush2.msra.mxu0 0.0
  %1383 = vmatprep.subr.mxu0 0.0
  %1384 = vmatpush2.msra.mxu0 0.0
  %1385 = vmatprep.subr.mxu0 0.0
  %1386 = vmatpush2.msra.mxu0 0.0
  %1387 = vmatprep.subr.mxu0 0.0
  %1388 = vmatpush2.msra.mxu0 0.0
  %1389 = vmatprep.subr.mxu0 0.0
  %1390 = vmatpush2.msra.mxu0 0.0
  %1391 = vmatprep.subr.mxu0 0.0
  %1392 = vmatpush2.msra.mxu0 0.0
  %1393 = vmatprep.subr.mxu0 0.0
  %1394 = vmatpush2.msra.mxu0 0.0
  %1395 = vmatprep.subr.mxu0 0.0
  %1396 = vmatpush2.msra.mxu0 0.0
  %1397 = vmatprep.subr.mxu0 0.0
  %1398 = vmatpush2.msra.mxu0 0.0
  %1399 = vmatprep.subr.mxu0 0.0
  %1400 = vmatpush2.msra.mxu0 0.0
  %1401 = vmatprep.subr.mxu0 0.0
  %1402 = vmatpush2.msra.mxu0 0.0
  %1403 = vmatprep.subr.mxu0 0.0
  %1404 = vmatpush2.msra.mxu0 0.0
  %1405 = vmatprep.subr.mxu0 0.0
  %1406 = vmatpush2.msra.mxu0 0.0
  %1407 = vmatprep.subr.mxu0 0.0
  %1408 = vmatpush2.msra.mxu0 0.0
  %1409 = vmatprep.subr.mxu0 0.0
  %1410 = vmatpush2.msra.mxu0 0.0
  %1411 = vmatprep.subr.mxu0 0.0
  %1412 = vmatpush2.msra.mxu0 0.0
  %1413 = vmatprep.mubr.f32.mxu0 0.0
  %1414 = vmatmul.mubr.f32.gmra.mxu0 %v1276
  %v1415 = vpop.f32.mrf.mxu0
  %v1416 = vadd.f32 0.0, %v1415
  %v1417 = vpop.f32.mrf.mxu0
  %1418 = vdwg.mxu0
  %v1420 = vrot.slane %v135, 4
  %v1422 = vadd.f32 %v1345, %v1420
  %v1424 = vrot.slane %v1416, 4
  %v1426 = vadd.f32 %v1347, %v1424
  %v1427 = vadd.f32 %v1426, %v155
  %v1429 = vrot.slane %v1427, 4
  %v1431 = vsel %vm49, %v1422, %v1429
  %v1432 = vxor.u32 %v1431, 2147483648
  %v1433 = vmul.f32 %v1432, 1.442695
  %v1434 = vpow.pop %v1433
  %v1435 = vadd.f32 %v1434, 1.0
  %v1436 = vrcp.pop %v1435
  %v1437 = vmul.f32 1.0, %v1436
  %v1438 = vtanh.pop %v1431
  %v1439 = vmul.f32 %v1437, %v1266
  %1441 = vrot.lane.b32.xlu0 %v1438, 64
  %v1442 = vpop.permute.xlu0 %1441
  %v1444 = vmul.f32 %v1437, %v1442
  %1446 = vrot.lane.b32.xlu0 %v1444, 32
  %v1447 = vpop.permute.xlu0 %1446
  %v1449 = vadd.f32 %v1439, %v1447
  %v1450 = vtanh.pop %v1449
  %1452 = vrot.lane.b32.xlu0 %v1450, 64
  %v1453 = vpop.permute.xlu0 %1452
  %v1455 = vmul.f32 %v1437, %v1453
  %1457 = vrot.lane.b32.xlu0 %v1455, 32
  %v1458 = vpop.permute.xlu0 %1457
  %v1459 = vsel %vm186, %v1458, 0
  %1461 = vmatprep.subr.mxu0 0.0
  %1462 = vmatpush1.msra.mxu0 0.0
  %1463 = vmatprep.subr.mxu0 0.0
  %1464 = vmatpush1.msra.mxu0 0.0
  %1465 = vmatprep.subr.mxu0 0.0
  %1466 = vmatpush1.msra.mxu0 0.0
  %1467 = vmatprep.subr.mxu0 0.0
  %1468 = vmatpush1.msra.mxu0 0.0
  %1469 = vmatprep.subr.mxu0 0.0
  %1470 = vmatpush1.msra.mxu0 0.0
  %1471 = vmatprep.subr.mxu0 0.0
  %1472 = vmatpush1.msra.mxu0 0.0
  %1473 = vmatprep.subr.mxu0 0.0
  %1474 = vmatpush1.msra.mxu0 0.0
  %1475 = vmatprep.subr.mxu0 0.0
  %1476 = vmatpush1.msra.mxu0 0.0
  %1477 = vmatprep.subr.mxu0 0.0
  %1478 = vmatpush1.msra.mxu0 0.0
  %1479 = vmatprep.subr.mxu0 0.0
  %1480 = vmatpush1.msra.mxu0 0.0
  %1481 = vmatprep.subr.mxu0 0.0
  %1482 = vmatpush1.msra.mxu0 0.0
  %1483 = vmatprep.subr.mxu0 0.0
  %1484 = vmatpush1.msra.mxu0 0.0
  %1485 = vmatprep.subr.mxu0 %v148
  %1486 = vmatpush1.msra.mxu0 %v147
  %1487 = vmatprep.subr.mxu0 %v145
  %1488 = vmatpush1.msra.mxu0 %v144
  %1489 = vmatprep.subr.mxu0 %v142
  %1490 = vmatpush1.msra.mxu0 %v141
  %1491 = vmatprep.subr.mxu0 %v139
  %1492 = vmatpush1.msra.mxu0 %v138
  %1493 = vmatprep.subr.mxu0 0.0
  %1494 = vmatpush2.msra.mxu0 0.0
  %1495 = vmatprep.subr.mxu0 0.0
  %1496 = vmatpush2.msra.mxu0 0.0
  %1497 = vmatprep.subr.mxu0 0.0
  %1498 = vmatpush2.msra.mxu0 0.0
  %1499 = vmatprep.subr.mxu0 0.0
  %1500 = vmatpush2.msra.mxu0 0.0
  %1501 = vmatprep.subr.mxu0 0.0
  %1502 = vmatpush2.msra.mxu0 0.0
  %1503 = vmatprep.subr.mxu0 0.0
  %1504 = vmatpush2.msra.mxu0 0.0
  %1505 = vmatprep.subr.mxu0 0.0
  %1506 = vmatpush2.msra.mxu0 0.0
  %1507 = vmatprep.subr.mxu0 0.0
  %1508 = vmatpush2.msra.mxu0 0.0
  %1509 = vmatprep.subr.mxu0 0.0
  %1510 = vmatpush2.msra.mxu0 0.0
  %1511 = vmatprep.subr.mxu0 0.0
  %1512 = vmatpush2.msra.mxu0 0.0
  %1513 = vmatprep.subr.mxu0 0.0
  %1514 = vmatpush2.msra.mxu0 0.0
  %1515 = vmatprep.subr.mxu0 0.0
  %1516 = vmatpush2.msra.mxu0 0.0
  %1517 = vmatprep.subr.mxu0 0.0
  %1518 = vmatpush2.msra.mxu0 0.0
  %1519 = vmatprep.subr.mxu0 0.0
  %1520 = vmatpush2.msra.mxu0 0.0
  %1521 = vmatprep.subr.mxu0 0.0
  %1522 = vmatpush2.msra.mxu0 0.0
  %1523 = vmatprep.subr.mxu0 0.0
  %1524 = vmatpush2.msra.mxu0 0.0
  %1525 = vmatprep.mubr.f32.mxu0 0.0
  %1526 = vmatmul.mubr.f32.gmra.mxu0 %v1459
  %v1527 = vpop.f32.mrf.mxu0
  %v1528 = vpop.f32.mrf.mxu0
  %v1529 = vadd.f32 0.0, %v1528
  %1530 = vdwg.mxu0
  %1531 = vmatprep.subr.mxu0 0.0
  %1532 = vmatpush1.msra.mxu0 0.0
  %1533 = vmatprep.subr.mxu0 0.0
  %1534 = vmatpush1.msra.mxu0 0.0
  %1535 = vmatprep.subr.mxu0 0.0
  %1536 = vmatpush1.msra.mxu0 0.0
  %1537 = vmatprep.subr.mxu0 0.0
  %1538 = vmatpush1.msra.mxu0 0.0
  %1539 = vmatprep.subr.mxu0 0.0
  %1540 = vmatpush1.msra.mxu0 0.0
  %1541 = vmatprep.subr.mxu0 0.0
  %1542 = vmatpush1.msra.mxu0 0.0
  %1543 = vmatprep.subr.mxu0 0.0
  %1544 = vmatpush1.msra.mxu0 0.0
  %1545 = vmatprep.subr.mxu0 0.0
  %1546 = vmatpush1.msra.mxu0 0.0
  %1547 = vmatprep.subr.mxu0 0.0
  %1548 = vmatpush1.msra.mxu0 0.0
  %1549 = vmatprep.subr.mxu0 0.0
  %1550 = vmatpush1.msra.mxu0 0.0
  %1551 = vmatprep.subr.mxu0 0.0
  %1552 = vmatpush1.msra.mxu0 0.0
  %1553 = vmatprep.subr.mxu0 0.0
  %1554 = vmatpush1.msra.mxu0 0.0
  %1555 = vmatprep.subr.mxu0 0.0
  %1556 = vmatpush1.msra.mxu0 %v149
  %1557 = vmatprep.subr.mxu0 0.0
  %1558 = vmatpush1.msra.mxu0 %v146
  %1559 = vmatprep.subr.mxu0 0.0
  %1560 = vmatpush1.msra.mxu0 %v143
  %1561 = vmatprep.subr.mxu0 0.0
  %1562 = vmatpush1.msra.mxu0 %v140
  %1563 = vmatprep.subr.mxu0 0.0
  %1564 = vmatpush2.msra.mxu0 0.0
  %1565 = vmatprep.subr.mxu0 0.0
  %1566 = vmatpush2.msra.mxu0 0.0
  %1567 = vmatprep.subr.mxu0 0.0
  %1568 = vmatpush2.msra.mxu0 0.0
  %1569 = vmatprep.subr.mxu0 0.0
  %1570 = vmatpush2.msra.mxu0 0.0
  %1571 = vmatprep.subr.mxu0 0.0
  %1572 = vmatpush2.msra.mxu0 0.0
  %1573 = vmatprep.subr.mxu0 0.0
  %1574 = vmatpush2.msra.mxu0 0.0
  %1575 = vmatprep.subr.mxu0 0.0
  %1576 = vmatpush2.msra.mxu0 0.0
  %1577 = vmatprep.subr.mxu0 0.0
  %1578 = vmatpush2.msra.mxu0 0.0
  %1579 = vmatprep.subr.mxu0 0.0
  %1580 = vmatpush2.msra.mxu0 0.0
  %1581 = vmatprep.subr.mxu0 0.0
  %1582 = vmatpush2.msra.mxu0 0.0
  %1583 = vmatprep.subr.mxu0 0.0
  %1584 = vmatpush2.msra.mxu0 0.0
  %1585 = vmatprep.subr.mxu0 0.0
  %1586 = vmatpush2.msra.mxu0 0.0
  %1587 = vmatprep.subr.mxu0 0.0
  %1588 = vmatpush2.msra.mxu0 0.0
  %1589 = vmatprep.subr.mxu0 0.0
  %1590 = vmatpush2.msra.mxu0 0.0
  %1591 = vmatprep.subr.mxu0 0.0
  %1592 = vmatpush2.msra.mxu0 0.0
  %1593 = vmatprep.subr.mxu0 0.0
  %1594 = vmatpush2.msra.mxu0 0.0
  %1595 = vmatprep.mubr.f32.mxu0 0.0
  %1596 = vmatmul.mubr.f32.gmra.mxu0 %v1459
  %v1597 = vpop.f32.mrf.mxu0
  %v1598 = vadd.f32 0.0, %v1597
  %v1599 = vpop.f32.mrf.mxu0
  %1600 = vdwg.mxu0
  %v1602 = vrot.slane %v1598, 4
  %v1604 = vadd.f32 %v1529, %v1602
  %v1605 = vadd.f32 %v1604, %v155
  %v1606 = vxor.u32 %v1605, 2147483648
  %v1607 = vmul.f32 %v1606, 1.442695
  %v1608 = vpow.pop %v1607
  %v1609 = vadd.f32 %v1608, 1.0
  %v1610 = vrcp.pop %v1609
  %v1611 = vmul.f32 1.0, %v1610
  %v1612 = vtanh.pop %v1605
  %v1614 = vrot.slane %v1449, 4
  %v1616 = vmul.f32 %v1611, %v1614
  %1618 = vrot.lane.b32.xlu0 %v1612, 64
  %v1619 = vpop.permute.xlu0 %1618
  %v1621 = vmul.f32 %v1611, %v1619
  %1623 = vrot.lane.b32.xlu0 %v1621, 32
  %v1624 = vpop.permute.xlu0 %1623
  %v1626 = vadd.f32 %v1616, %v1624
  %v1627 = vtanh.pop %v1626
  %1629 = vrot.lane.b32.xlu0 %v1627, 64
  %v1630 = vpop.permute.xlu0 %1629
  %v1632 = vmul.f32 %v1611, %v1630
  %v1633 = vrot.slane %v366, 4
  %v1635 = vrot.slane %v729, 4
  %v1637 = vrot.slane %v1092, 4
  %v1639 = vrot.slane %v1455, 4
  %v1642 = vrot.slane %v1632, 4
  %v1644 = vsel %vm49, %v1633, %v546
  %v1645 = vsel %vm49, %v1635, %v909
  %v1646 = vsel %vm49, %v1637, %v1272
  %v1647 = vsel %vm49, %v1639, %v1642
  %v1648 = vld [vmem:[%s5] sm:$0x1]
  %v1650 = vlaneseq
  %v1651 = vshrl.u32 %v1650, 7
  %v1652 = vsub.s32 0, %v1651
  %v1653 = vrot.slane %v1648, %v1652
  %1654 = vrot.lane.b32.xlu0 %v1653, 96
  %v1655 = vpop.permute.xlu0 %1654
  %v1657 = vmul.f32 %v1644, %v1655
  %v1658 = vmul.f32 %v1645, %v1655
  %v1659 = vmul.f32 %v1646, %v1655
  %v1660 = vmul.f32 %v1647, %v1655
  %1665 = vrot.lane.b32.xlu0 %v1657, 32
  %v1666 = vpop.permute.xlu0 %1665
  %1667 = vrot.lane.b32.xlu0 %v1658, 32
  %v1668 = vpop.permute.xlu0 %1667
  %1669 = vrot.lane.b32.xlu0 %v1659, 32
  %v1670 = vpop.permute.xlu0 %1669
  %1671 = vrot.lane.b32.xlu0 %v1660, 32
  %v1672 = vpop.permute.xlu0 %1671
  %v1677 = vsel %vm186, %v1666, 0.0
  %1678 = vadd.xlane.f32.xlu0 %v1677
  %v1679 = vpop.xlane.xlu0 %1678
  %v1680 = vsel %vm186, %v1668, 0.0
  %1681 = vadd.xlane.f32.xlu0 %v1680
  %v1682 = vpop.xlane.xlu0 %1681
  %v1683 = vsel %vm186, %v1670, 0.0
  %1684 = vadd.xlane.f32.xlu0 %v1683
  %v1685 = vpop.xlane.xlu0 %1684
  %v1686 = vsel %vm186, %v1672, 0.0
  %1687 = vadd.xlane.f32.xlu0 %v1686
  %v1688 = vpop.xlane.xlu0 %1687
  %vm1689 = vcmask 7168
  %1690 = vst.msk [vmem:[%s6] sm:$0xff] %vm1689, %v1679
  %1691 = vst.msk [vmem:[%s6 + $0x8] sm:$0xff] %vm1689, %v1682
  %1692 = vst.msk [vmem:[%s6 + $0x10] sm:$0xff] %vm1689, %v1685
  %1693 = vst.msk [vmem:[%s6 + $0x18] sm:$0xff] %vm1689, %v1688
  // Predicated region
  $region26: #{optiver_model_forward.1} parent=0 // pred_check
    _
  $region27: #{optiver_model_forward.1} parent=0 // pred_check_branch
    %1695 = sbr.rel (0) target = $region29
  $region28: #{optiver_model_forward.1} parent=0 // pred_region
    _
  $region29: #{optiver_model_forward.1} parent=0 // pred_fallthru
    _
  // Predicated region
  $region30: #{optiver_model_forward.1} parent=0 // pred_check
    _
  $region31: #{optiver_model_forward.1} parent=0 // pred_check_branch
    %1697 = sbr.rel (0) target = $region33
  $region32: #{optiver_model_forward.1} parent=0 // pred_region
    _
  $region33: #{optiver_model_forward.1} parent=0 // pred_fallthru
    _

</llo_original>
